<compile_context>
chip_gen: v7x
topology: tpu7x:2x2x1
jax: 0.10.0
libtpu: 0.0.40
codegen_flags: <defaults>
</compile_context>

<pallas_src>
import functools
import math

import jax
import jax.numpy as jnp
from jax.experimental import pallas as pl
from jax.experimental.pallas import tpu as pltpu

NEG_INF = -1.0e10   # matches the module's in-place masked-fill value
LN_EPS = 1e-5       # PyTorch LayerNorm default


def _layer_norm(x, w, b):
    mean = jnp.mean(x, axis=-1, keepdims=True)
    var = jnp.mean(jnp.square(x - mean), axis=-1, keepdims=True)
    return (x - mean) * jax.lax.rsqrt(var + LN_EPS) * w + b


def self_att_kernel(
    x_ref, pm_col_ref, pm_row_ref,
    lnx_w_ref, lnx_b_ref,
    wkvq_ref, bkvq_ref, qscale_ref, qscale_attn_ref,
    wy_ref, by_ref, wf1_ref, bf1_ref, wf2_ref, bf2_ref,
    lnz_w_ref, lnz_b_ref,
    z_ref, q_ref, k_ref, v_ref,
    *, batch_block, head_num, head_dim, seq_len, feat_dim,
    mm_dtype, exact_softmax,
):
    m_rows = batch_block * seq_len
    D = feat_dim

    # ---- LayerNorm X (f32) over the folded (B_blk*T, D) slab ----
    x = x_ref[...].reshape(m_rows, D)
    xn = _layer_norm(x, lnx_w_ref[...], lnx_b_ref[...])
    xn_mm = xn.astype(mm_dtype)

    # ---- fused K|V|Q0 projection (single MXU call), Linear + ReLU ----
    kvq = jnp.maximum(
        jnp.dot(xn_mm, wkvq_ref[...], preferred_element_type=jnp.float32)
        + bkvq_ref[...], 0.0)                               # (M, 3D) f32
    K = kvq[:, 0 * D:1 * D]
    V = kvq[:, 1 * D:2 * D]
    Q0 = kvq[:, 2 * D:3 * D]

    # ScaleLayer (returned Q) and the pre-folded attention scale: exactly one
    # (M, D) VPU scale pass per purpose.
    Q = Q0 * qscale_ref[...]                                # post-ScaleLayer Q
    Qa = Q0 * qscale_attn_ref[...]                          # qscale / sqrt(H)

    q_ref[...] = Q.reshape(batch_block, seq_len, D)
    k_ref[...] = K.reshape(batch_block, seq_len, D)
    v_ref[...] = V.reshape(batch_block, seq_len, D)

    # ---- keep mask built in VMEM from the two O(T) padding-mask views ----
    # keep[b, q, k] = pm[b, q] * pm[b, k]: reproduces both in-place masked
    # assignments of the PyTorch module (query rows AND key cols -> -1e10).
    keep = pm_col_ref[...] * pm_row_ref[...]                # (B_blk, T, T) f32
    keep_s = jnp.concatenate([keep] * head_num, axis=0) > 0.5   # (H*B_blk, T, T)

    # ---- head-batched attention: heads stacked along the batch axis ----
    Qa3 = Qa.astype(mm_dtype).reshape(batch_block, seq_len, D)
    K3 = K.astype(mm_dtype).reshape(batch_block, seq_len, D)
    V3 = V.astype(mm_dtype).reshape(batch_block, seq_len, D)

    def stack_heads(t3):  # (B_blk, T, D) -> (H*B_blk, T, Dh); major-dim concat
        return jnp.concatenate(
            [t3[:, :, h * head_dim:(h + 1) * head_dim] for h in range(head_num)],
            axis=0)

    Qs = stack_heads(Qa3)
    Ks = stack_heads(K3)
    Vs = stack_heads(V3)

    energy = jnp.einsum('bqd,bkd->bqk', Qs, Ks,
                        preferred_element_type=jnp.float32)     # (H*B_blk, T, T)
    energy = jnp.where(keep_s, energy, NEG_INF)
    e_max = jnp.max(energy, axis=-1, keepdims=True)
    p = jnp.exp(energy - e_max)
    denom = jnp.sum(p, axis=-1, keepdims=True)
    if exact_softmax:
        attn = p / denom                                  # exact (f32 parity)
    else:
        attn = p * pl.reciprocal(denom, approx=True)      # EUP slot, ~1e-4 rel
    Ys = jnp.einsum('bqk,bkd->bqd', attn.astype(mm_dtype), Vs,
                    preferred_element_type=jnp.float32)         # (H*B_blk, T, Dh)
    # NOTE: fully padded query rows get uniform 1/T attention (all entries at
    # -1e10), matching PyTorch's masking semantics.

    # ---- Y2 projection with the head-concat folded in, + residual ----
    # Y1 @ Wy == sum_h Y_h @ Wy[h*Dh:(h+1)*Dh, :], so Y1 never materializes and
    # no per-head scratch / minor-dim concat is needed.
    y2_pre = jnp.zeros((m_rows, D), jnp.float32)
    for h in range(head_num):
        Yh = Ys[h * batch_block:(h + 1) * batch_block].reshape(m_rows, head_dim)
        Wyh = wy_ref[h * head_dim:(h + 1) * head_dim, :]
        y2_pre = y2_pre + jnp.dot(Yh.astype(mm_dtype), Wyh,
                                  preferred_element_type=jnp.float32)
    Y2 = jnp.maximum(y2_pre + by_ref[...], 0.0)
    S = Y2 + xn                      # residual uses the post-LayerNorm x (as in torch)

    # ---- FFN ----
    F1 = jnp.maximum(
        jnp.dot(S.astype(mm_dtype), wf1_ref[...],
                preferred_element_type=jnp.float32) + bf1_ref[...], 0.0)
    F2 = jnp.maximum(
        jnp.dot(F1.astype(mm_dtype), wf2_ref[...],
                preferred_element_type=jnp.float32) + bf2_ref[...], 0.0)

    # ---- LayerNorm Z (f32) ----
    Z = _layer_norm(F2, lnz_w_ref[...], lnz_b_ref[...])
    z_ref[...] = Z.reshape(batch_block, seq_len, D)


def self_att_layer(x, padding_mask, params, *, head_num=4, batch_block=None,
                   matmul_dtype=jnp.bfloat16, row_target=512, min_grid_steps=1,
                   vmem_limit_bytes=None):
    """x: (B, T, D) f32, padding_mask: (B, T) bool (True = valid).

    Returns (Z, Q, K, V) with Z (B, T, D) and Q/K/V (B, H, T, Dh), matching the
    PyTorch SelfAttLayer (across_time=True) forward.

    matmul_dtype=jnp.bfloat16 (default) is recommended on v5e, v6e and v7x —
    all elementwise / LayerNorm / softmax / accumulation math stays f32.  Use
    matmul_dtype=jnp.float32 for bit-closest parity with the f32 module.
    On v7x pass min_grid_steps=2 (two TensorCores) and set vmem_limit_bytes
    explicitly if blocks grow past the 32 MiB scoped default.
    """
    B, T, D = x.shape
    assert D % head_num == 0
    Dh = D // head_num
    inv_scale = 1.0 / math.sqrt(float(head_num))   # module: energy / sqrt(head_num)

    # ---- batch_block: fold batch elements so matmul M = batch_block*T targets
    # `row_target` rows (>=128 on v5e, 256-512 on v6e/v7x).  Candidates are kept
    # to d == B or d % 8 == 0 so every BlockSpec second-minor dim stays legal.
    if batch_block is None:
        valid = [d for d in range(1, B + 1)
                 if B % d == 0 and (d == B or d % 8 == 0)]
        fitting = [d for d in valid if d * T <= max(row_target, T)]
        preferred = [d for d in fitting if (B // d) >= min_grid_steps]
        if preferred:
            batch_block = max(preferred)
        elif fitting:
            batch_block = max(fitting)
        else:
            batch_block = min(valid)
    assert B % batch_block == 0
    grid = (B // batch_block,)

    # Only the O(T) padding mask goes to HBM (two tiny views); the (T, T) keep
    # mask is built in VMEM.
    pm = padding_mask.astype(jnp.float32)
    pm_col = pm[:, :, None]   # (B, T, 1)
    pm_row = pm[:, None, :]   # (B, 1, T)

    def mm_cast(w):   # halves weight DMA bytes on the bf16 path
        return w.astype(matmul_dtype)

    # Fused projection weight [K | V | Q0] and pre-folded attention scale.
    wkvq = mm_cast(jnp.concatenate(
        [params["wk"], params["wv"], params["wq"]], axis=1))        # (D, 3D)
    bkvq = jnp.concatenate([params["bk"], params["bv"], params["bq"]], axis=1)
    qscale = params["qscale"]                                        # (1, D)
    qscale_attn = qscale * inv_scale

    param_list = [
        params["lnx_w"], params["lnx_b"],
        wkvq, bkvq, qscale, qscale_attn,
        mm_cast(params["wy"]), params["by"],
        mm_cast(params["wf1"]), params["bf1"],
        mm_cast(params["wf2"]), params["bf2"],
        params["lnz_w"], params["lnz_b"],
    ]

    in_specs = [
        pl.BlockSpec((batch_block, T, D), lambda i: (i, 0, 0)),
        pl.BlockSpec((batch_block, T, 1), lambda i: (i, 0, 0)),
        pl.BlockSpec((batch_block, 1, T), lambda i: (i, 0, 0)),
    ] + [pl.BlockSpec(p.shape, lambda i: (0, 0)) for p in param_list]
    # TODO(synk): at production D, mark the grid-invariant weight specs with
    # pipeline_mode=pl.Buffered(1) to halve their VMEM footprint.

    slab_spec = pl.BlockSpec((batch_block, T, D), lambda i: (i, 0, 0))
    out_specs = [slab_spec, slab_spec, slab_spec, slab_spec]
    out_shape = [jax.ShapeDtypeStruct((B, T, D), jnp.float32)] * 4

    kernel = functools.partial(
        self_att_kernel,
        batch_block=batch_block, head_num=head_num, head_dim=Dh,
        seq_len=T, feat_dim=D, mm_dtype=matmul_dtype,
        exact_softmax=(matmul_dtype == jnp.float32))

    cp_kwargs = dict(dimension_semantics=("parallel",))
    if vmem_limit_bytes is not None:
        cp_kwargs["vmem_limit_bytes"] = int(vmem_limit_bytes)

    z, q, k, v = pl.pallas_call(
        kernel,
        out_shape=out_shape,
        grid=grid,
        in_specs=in_specs,
        out_specs=out_specs,
        compiler_params=pltpu.CompilerParams(**cp_kwargs),
    )(x, pm_col, pm_row, *param_list)

    # Cheap XLA layout plumbing: present Q/K/V in the module's permuted layout.
    def to_heads(t):
        return t.reshape(B, T, head_num, Dh).transpose(0, 2, 1, 3)

    return z, to_heads(q), to_heads(k), to_heads(v)


def init_params(key, feature_dim, head_num, k):
    D, Dh, kD = feature_dim, feature_dim // head_num, k * feature_dim
    keys = jax.random.split(key, 12)

    def lin(kw, kb, fan_in, fan_out):
        w = jax.random.normal(kw, (fan_in, fan_out), jnp.float32) * 0.1
        b = jax.random.normal(kb, (1, fan_out), jnp.float32) * 0.01
        return w, b

    wk, bk = lin(keys[0], keys[1], D, D)
    wv, bv = lin(keys[2], keys[3], D, D)
    wq, bq = lin(keys[4], keys[5], D, D)
    wy, by = lin(keys[6], keys[7], D, D)
    wf1, bf1 = lin(keys[8], keys[9], D, kD)
    wf2, bf2 = lin(keys[10], keys[11], kD, D)

    # ScaleLayer param: shape (Dh,), filled with 0.001; tiled across heads -> (1, D)
    qscale = jnp.tile(jnp.full((Dh,), 0.001, jnp.float32), head_num).reshape(1, D)

    return {
        "lnx_w": jnp.ones((1, D), jnp.float32), "lnx_b": jnp.zeros((1, D), jnp.float32),
        "wk": wk, "bk": bk, "wv": wv, "bv": bv, "wq": wq, "bq": bq,
        "qscale": qscale,
        "wy": wy, "by": by, "wf1": wf1, "bf1": bf1, "wf2": wf2, "bf2": bf2,
        "lnz_w": jnp.ones((1, D), jnp.float32), "lnz_b": jnp.zeros((1, D), jnp.float32),
    }


if __name__ == "__main__":
    # Small shapes consistent with the module: time_steps=T, feature_dim=D,
    # head_num=4, k=4.  (T kept a multiple of 8 so the batch-fold reshapes are
    # layout-free on TPU.)
    B, T, D, H, K_FF = 2, 8, 32, 4, 4

    key = jax.random.PRNGKey(0)
    k_x, k_p = jax.random.split(key)
    x = jax.random.normal(k_x, (B, T, D), jnp.float32)

    # padding_mask: True = valid, False = padded (pad last two steps of batch 1)
    padding_mask = jnp.ones((B, T), jnp.bool_)
    padding_mask = padding_mask.at[1, T - 2:].set(False)

    params = init_params(k_p, D, H, K_FF)

    # f32 matmul operands: exact module semantics (exact softmax divide).
    Z, Q, Kt, Vt = self_att_layer(x, padding_mask, params, head_num=H,
                                  matmul_dtype=jnp.float32)
    jax.block_until_ready((Z, Q, Kt, Vt))
    assert Z.shape == (B, T, D)
    assert Q.shape == Kt.shape == Vt.shape == (B, H, T, D // H)

    # Default bf16 matmul operands (recommended on v5e / v6e / v7x); f32 accumulation.
    Zb, Qb, Kb, Vb = self_att_layer(x, padding_mask, params, head_num=H)
    jax.block_until_ready((Zb, Qb, Kb, Vb))
    assert Zb.shape == (B, T, D)

    print("KERNEL_OK")
</pallas_src>

<mosaic_0001>
module attributes {stable_mosaic.version = 11 : i64} {
  func.func @self_att_kernel(%arg0: i32, %arg1: memref<2x8x32xf32, #tpu.memory_space<vmem>>, %arg2: memref<2x8x1xf32, #tpu.memory_space<vmem>>, %arg3: memref<2x1x8xf32, #tpu.memory_space<vmem>>, %arg4: memref<1x32xf32, #tpu.memory_space<vmem>>, %arg5: memref<1x32xf32, #tpu.memory_space<vmem>>, %arg6: memref<32x96xf32, #tpu.memory_space<vmem>>, %arg7: memref<1x96xf32, #tpu.memory_space<vmem>>, %arg8: memref<1x32xf32, #tpu.memory_space<vmem>>, %arg9: memref<1x32xf32, #tpu.memory_space<vmem>>, %arg10: memref<32x32xf32, #tpu.memory_space<vmem>>, %arg11: memref<1x32xf32, #tpu.memory_space<vmem>>, %arg12: memref<32x128xf32, #tpu.memory_space<vmem>>, %arg13: memref<1x128xf32, #tpu.memory_space<vmem>>, %arg14: memref<128x32xf32, #tpu.memory_space<vmem>>, %arg15: memref<1x32xf32, #tpu.memory_space<vmem>>, %arg16: memref<1x32xf32, #tpu.memory_space<vmem>>, %arg17: memref<1x32xf32, #tpu.memory_space<vmem>>, %arg18: memref<2x8x32xf32, #tpu.memory_space<vmem>>, %arg19: memref<2x8x32xf32, #tpu.memory_space<vmem>>, %arg20: memref<2x8x32xf32, #tpu.memory_space<vmem>>, %arg21: memref<2x8x32xf32, #tpu.memory_space<vmem>>) attributes {dimension_semantics = [#tpu.dimension_semantics<parallel>], iteration_bounds = array<i64: 1>, scalar_prefetch = 0 : i64, scratch_operands = 0 : i64, tpu.core_type = #tpu.core_type<tc>, window_params = [{transform_indices = @transform_0, window_bounds = array<i64: 2, 8, 32>}, {transform_indices = @transform_1, window_bounds = array<i64: 2, 8, 1>}, {transform_indices = @transform_2, window_bounds = array<i64: 2, 1, 8>}, {pipeline_mode = #tpu.pipeline_mode<synchronous>, transform_indices = @transform_3, window_bounds = array<i64: 1, 32>}, {pipeline_mode = #tpu.pipeline_mode<synchronous>, transform_indices = @transform_4, window_bounds = array<i64: 1, 32>}, {pipeline_mode = #tpu.pipeline_mode<synchronous>, transform_indices = @transform_5, window_bounds = array<i64: 32, 96>}, {pipeline_mode = #tpu.pipeline_mode<synchronous>, transform_indices = @transform_6, window_bounds = array<i64: 1, 96>}, {pipeline_mode = #tpu.pipeline_mode<synchronous>, transform_indices = @transform_7, window_bounds = array<i64: 1, 32>}, {pipeline_mode = #tpu.pipeline_mode<synchronous>, transform_indices = @transform_8, window_bounds = array<i64: 1, 32>}, {pipeline_mode = #tpu.pipeline_mode<synchronous>, transform_indices = @transform_9, window_bounds = array<i64: 32, 32>}, {pipeline_mode = #tpu.pipeline_mode<synchronous>, transform_indices = @transform_10, window_bounds = array<i64: 1, 32>}, {pipeline_mode = #tpu.pipeline_mode<synchronous>, transform_indices = @transform_11, window_bounds = array<i64: 32, 128>}, {pipeline_mode = #tpu.pipeline_mode<synchronous>, transform_indices = @transform_12, window_bounds = array<i64: 1, 128>}, {pipeline_mode = #tpu.pipeline_mode<synchronous>, transform_indices = @transform_13, window_bounds = array<i64: 128, 32>}, {pipeline_mode = #tpu.pipeline_mode<synchronous>, transform_indices = @transform_14, window_bounds = array<i64: 1, 32>}, {pipeline_mode = #tpu.pipeline_mode<synchronous>, transform_indices = @transform_15, window_bounds = array<i64: 1, 32>}, {pipeline_mode = #tpu.pipeline_mode<synchronous>, transform_indices = @transform_16, window_bounds = array<i64: 1, 32>}, {transform_indices = @transform_17, window_bounds = array<i64: 2, 8, 32>}, {transform_indices = @transform_18, window_bounds = array<i64: 2, 8, 32>}, {transform_indices = @transform_19, window_bounds = array<i64: 2, 8, 32>}, {transform_indices = @transform_20, window_bounds = array<i64: 2, 8, 32>}]} {
    %c0 = arith.constant 0 : index
    %c0_0 = arith.constant 0 : index
    %c0_1 = arith.constant 0 : index
    %0 = vector.load %arg1[%c0, %c0_0, %c0_1] : memref<2x8x32xf32, #tpu.memory_space<vmem>>, vector<2x8x32xf32>
    %1 = vector.shape_cast %0 : vector<2x8x32xf32> to vector<16x32xf32>
    %c0_2 = arith.constant 0 : index
    %c0_3 = arith.constant 0 : index
    %2 = vector.load %arg4[%c0_2, %c0_3] : memref<1x32xf32, #tpu.memory_space<vmem>>, vector<1x32xf32>
    %c0_4 = arith.constant 0 : index
    %c0_5 = arith.constant 0 : index
    %3 = vector.load %arg5[%c0_4, %c0_5] : memref<1x32xf32, #tpu.memory_space<vmem>>, vector<1x32xf32>
    %cst = arith.constant dense<0.000000e+00> : vector<16xf32>
    %4 = vector.multi_reduction <add>, %1, %cst [1] : vector<16x32xf32> to vector<16xf32>
    %5 = vector.shape_cast %4 : vector<16xf32> to vector<16x1xf32>
    %cst_6 = arith.constant 3.200000e+01 : f32
    %6 = vector.broadcast %cst_6 : f32 to vector<16x1xf32>
    %7 = arith.divf %5, %6 : vector<16x1xf32>
    %8 = vector.broadcast %7 : vector<16x1xf32> to vector<16x32xf32>
    %9 = arith.subf %1, %8 : vector<16x32xf32>
    %10 = arith.mulf %9, %9 : vector<16x32xf32>
    %cst_7 = arith.constant dense<0.000000e+00> : vector<16xf32>
    %11 = vector.multi_reduction <add>, %10, %cst_7 [1] : vector<16x32xf32> to vector<16xf32>
    %12 = vector.shape_cast %11 : vector<16xf32> to vector<16x1xf32>
    %cst_8 = arith.constant 3.200000e+01 : f32
    %13 = vector.broadcast %cst_8 : f32 to vector<16x1xf32>
    %14 = arith.divf %12, %13 : vector<16x1xf32>
    %15 = vector.broadcast %7 : vector<16x1xf32> to vector<16x32xf32>
    %16 = arith.subf %1, %15 : vector<16x32xf32>
    %cst_9 = arith.constant 9.99999974E-6 : f32
    %17 = vector.broadcast %cst_9 : f32 to vector<16x1xf32>
    %18 = arith.addf %14, %17 : vector<16x1xf32>
    %19 = math.rsqrt %18 : vector<16x1xf32>
    %20 = vector.broadcast %19 : vector<16x1xf32> to vector<16x32xf32>
    %21 = arith.mulf %16, %20 : vector<16x32xf32>
    %22 = vector.broadcast %2 : vector<1x32xf32> to vector<16x32xf32>
    %23 = arith.mulf %21, %22 : vector<16x32xf32>
    %24 = vector.broadcast %3 : vector<1x32xf32> to vector<16x32xf32>
    %25 = arith.addf %23, %24 : vector<16x32xf32>
    %c0_10 = arith.constant 0 : index
    %c0_11 = arith.constant 0 : index
    %26 = vector.load %arg6[%c0_10, %c0_11] : memref<32x96xf32, #tpu.memory_space<vmem>>, vector<32x96xf32>
    %cst_12 = arith.constant dense<0.000000e+00> : vector<16x96xf32>
    %27 = tpu.matmul %25, %26, %cst_12 {dimension_numbers = #tpu.dot_dimension_numbers<[1], [0], [0], [1], [0, 0, 1, 1], [], []>} : vector<16x32xf32>, vector<32x96xf32>, vector<16x96xf32> -> vector<16x96xf32>
    %c0_13 = arith.constant 0 : index
    %c0_14 = arith.constant 0 : index
    %28 = vector.load %arg7[%c0_13, %c0_14] : memref<1x96xf32, #tpu.memory_space<vmem>>, vector<1x96xf32>
    %29 = vector.broadcast %28 : vector<1x96xf32> to vector<16x96xf32>
    %30 = arith.addf %27, %29 : vector<16x96xf32>
    %cst_15 = arith.constant 0.000000e+00 : f32
    %31 = vector.broadcast %cst_15 : f32 to vector<16x96xf32>
    %32 = arith.maximumf %30, %31 : vector<16x96xf32>
    %33 = vector.extract_strided_slice %32 {offsets = [0, 0], sizes = [16, 32], strides = [1, 1]} : vector<16x96xf32> to vector<16x32xf32>
    %34 = vector.extract_strided_slice %32 {offsets = [0, 32], sizes = [16, 32], strides = [1, 1]} : vector<16x96xf32> to vector<16x32xf32>
    %35 = vector.extract_strided_slice %32 {offsets = [0, 64], sizes = [16, 32], strides = [1, 1]} : vector<16x96xf32> to vector<16x32xf32>
    %c0_16 = arith.constant 0 : index
    %c0_17 = arith.constant 0 : index
    %36 = vector.load %arg8[%c0_16, %c0_17] : memref<1x32xf32, #tpu.memory_space<vmem>>, vector<1x32xf32>
    %37 = vector.broadcast %36 : vector<1x32xf32> to vector<16x32xf32>
    %38 = arith.mulf %35, %37 : vector<16x32xf32>
    %c0_18 = arith.constant 0 : index
    %c0_19 = arith.constant 0 : index
    %39 = vector.load %arg9[%c0_18, %c0_19] : memref<1x32xf32, #tpu.memory_space<vmem>>, vector<1x32xf32>
    %40 = vector.broadcast %39 : vector<1x32xf32> to vector<16x32xf32>
    %41 = arith.mulf %35, %40 : vector<16x32xf32>
    %42 = vector.shape_cast %38 : vector<16x32xf32> to vector<2x8x32xf32>
    %c0_20 = arith.constant 0 : index
    %c0_21 = arith.constant 0 : index
    %c0_22 = arith.constant 0 : index
    %43 = vector.load %arg19[%c0_20, %c0_21, %c0_22] : memref<2x8x32xf32, #tpu.memory_space<vmem>>, vector<2x8x32xf32>
    tpu.vector_store %arg19[%c0_20, %c0_21, %c0_22], %42 {strides = array<i32>} : memref<2x8x32xf32, #tpu.memory_space<vmem>>, vector<2x8x32xf32>,
    %44 = vector.shape_cast %33 : vector<16x32xf32> to vector<2x8x32xf32>
    %c0_23 = arith.constant 0 : index
    %c0_24 = arith.constant 0 : index
    %c0_25 = arith.constant 0 : index
    %45 = vector.load %arg20[%c0_23, %c0_24, %c0_25] : memref<2x8x32xf32, #tpu.memory_space<vmem>>, vector<2x8x32xf32>
    tpu.vector_store %arg20[%c0_23, %c0_24, %c0_25], %44 {strides = array<i32>} : memref<2x8x32xf32, #tpu.memory_space<vmem>>, vector<2x8x32xf32>,
    %46 = vector.shape_cast %34 : vector<16x32xf32> to vector<2x8x32xf32>
    %c0_26 = arith.constant 0 : index
    %c0_27 = arith.constant 0 : index
    %c0_28 = arith.constant 0 : index
    %47 = vector.load %arg21[%c0_26, %c0_27, %c0_28] : memref<2x8x32xf32, #tpu.memory_space<vmem>>, vector<2x8x32xf32>
    tpu.vector_store %arg21[%c0_26, %c0_27, %c0_28], %46 {strides = array<i32>} : memref<2x8x32xf32, #tpu.memory_space<vmem>>, vector<2x8x32xf32>,
    %c0_29 = arith.constant 0 : index
    %c0_30 = arith.constant 0 : index
    %c0_31 = arith.constant 0 : index
    %48 = vector.load %arg2[%c0_29, %c0_30, %c0_31] : memref<2x8x1xf32, #tpu.memory_space<vmem>>, vector<2x8x1xf32>
    %c0_32 = arith.constant 0 : index
    %c0_33 = arith.constant 0 : index
    %c0_34 = arith.constant 0 : index
    %49 = vector.load %arg3[%c0_32, %c0_33, %c0_34] : memref<2x1x8xf32, #tpu.memory_space<vmem>>, vector<2x1x8xf32>
    %50 = vector.broadcast %48 : vector<2x8x1xf32> to vector<2x8x8xf32>
    %51 = vector.broadcast %49 : vector<2x1x8xf32> to vector<2x8x8xf32>
    %52 = arith.mulf %50, %51 : vector<2x8x8xf32>
    %53 = tpu.concatenate %52, %52, %52, %52 in 0 : vector<2x8x8xf32>, vector<2x8x8xf32>, vector<2x8x8xf32>, vector<2x8x8xf32> -> vector<8x8x8xf32>
    %cst_35 = arith.constant 5.000000e-01 : f32
    %54 = vector.broadcast %cst_35 : f32 to vector<8x8x8xf32>
    %55 = arith.cmpf ogt, %53, %54 : vector<8x8x8xf32>
    %56 = vector.shape_cast %41 : vector<16x32xf32> to vector<2x8x32xf32>
    %57 = vector.shape_cast %33 : vector<16x32xf32> to vector<2x8x32xf32>
    %58 = vector.shape_cast %34 : vector<16x32xf32> to vector<2x8x32xf32>
    %59 = vector.extract_strided_slice %56 {offsets = [0, 0, 0], sizes = [2, 8, 8], strides = [1, 1, 1]} : vector<2x8x32xf32> to vector<2x8x8xf32>
    %60 = vector.extract_strided_slice %56 {offsets = [0, 0, 8], sizes = [2, 8, 8], strides = [1, 1, 1]} : vector<2x8x32xf32> to vector<2x8x8xf32>
    %61 = vector.extract_strided_slice %56 {offsets = [0, 0, 16], sizes = [2, 8, 8], strides = [1, 1, 1]} : vector<2x8x32xf32> to vector<2x8x8xf32>
    %62 = vector.extract_strided_slice %56 {offsets = [0, 0, 24], sizes = [2, 8, 8], strides = [1, 1, 1]} : vector<2x8x32xf32> to vector<2x8x8xf32>
    %63 = tpu.concatenate %59, %60, %61, %62 in 0 : vector<2x8x8xf32>, vector<2x8x8xf32>, vector<2x8x8xf32>, vector<2x8x8xf32> -> vector<8x8x8xf32>
    %64 = vector.extract_strided_slice %57 {offsets = [0, 0, 0], sizes = [2, 8, 8], strides = [1, 1, 1]} : vector<2x8x32xf32> to vector<2x8x8xf32>
    %65 = vector.extract_strided_slice %57 {offsets = [0, 0, 8], sizes = [2, 8, 8], strides = [1, 1, 1]} : vector<2x8x32xf32> to vector<2x8x8xf32>
    %66 = vector.extract_strided_slice %57 {offsets = [0, 0, 16], sizes = [2, 8, 8], strides = [1, 1, 1]} : vector<2x8x32xf32> to vector<2x8x8xf32>
    %67 = vector.extract_strided_slice %57 {offsets = [0, 0, 24], sizes = [2, 8, 8], strides = [1, 1, 1]} : vector<2x8x32xf32> to vector<2x8x8xf32>
    %68 = tpu.concatenate %64, %65, %66, %67 in 0 : vector<2x8x8xf32>, vector<2x8x8xf32>, vector<2x8x8xf32>, vector<2x8x8xf32> -> vector<8x8x8xf32>
    %69 = vector.extract_strided_slice %58 {offsets = [0, 0, 0], sizes = [2, 8, 8], strides = [1, 1, 1]} : vector<2x8x32xf32> to vector<2x8x8xf32>
    %70 = vector.extract_strided_slice %58 {offsets = [0, 0, 8], sizes = [2, 8, 8], strides = [1, 1, 1]} : vector<2x8x32xf32> to vector<2x8x8xf32>
    %71 = vector.extract_strided_slice %58 {offsets = [0, 0, 16], sizes = [2, 8, 8], strides = [1, 1, 1]} : vector<2x8x32xf32> to vector<2x8x8xf32>
    %72 = vector.extract_strided_slice %58 {offsets = [0, 0, 24], sizes = [2, 8, 8], strides = [1, 1, 1]} : vector<2x8x32xf32> to vector<2x8x8xf32>
    %73 = tpu.concatenate %69, %70, %71, %72 in 0 : vector<2x8x8xf32>, vector<2x8x8xf32>, vector<2x8x8xf32>, vector<2x8x8xf32> -> vector<8x8x8xf32>
    "tpu.trace_start"() <{level = 10 : i32, message = "bqd,bkd->bqk"}> : () -> ()
    %cst_36 = arith.constant dense<0.000000e+00> : vector<8x8x8xf32>
    %74 = tpu.matmul %63, %68, %cst_36 {dimension_numbers = #tpu.dot_dimension_numbers<[2], [2], [1], [1], [0, 0, 0, 1, 1, 1], [0], [0]>} : vector<8x8x8xf32>, vector<8x8x8xf32>, vector<8x8x8xf32> -> vector<8x8x8xf32>
    %cst_37 = arith.constant -1.000000e+10 : f32
    "tpu.trace_stop"() : () -> ()
    %75 = vector.broadcast %cst_37 : f32 to vector<8x8x8xf32>
    %76 = arith.select %55, %74, %75 : vector<8x8x8xi1>, vector<8x8x8xf32>
    %cst_38 = arith.constant dense<0xFF800000> : vector<8x8xf32>
    %77 = vector.multi_reduction <maximumf>, %76, %cst_38 [2] : vector<8x8x8xf32> to vector<8x8xf32>
    %78 = vector.shape_cast %77 : vector<8x8xf32> to vector<8x8x1xf32>
    %79 = vector.broadcast %78 : vector<8x8x1xf32> to vector<8x8x8xf32>
    %80 = arith.subf %76, %79 : vector<8x8x8xf32>
    %81 = math.exp %80 : vector<8x8x8xf32>
    %cst_39 = arith.constant dense<0.000000e+00> : vector<8x8xf32>
    %82 = vector.multi_reduction <add>, %81, %cst_39 [2] : vector<8x8x8xf32> to vector<8x8xf32>
    %83 = vector.shape_cast %82 : vector<8x8xf32> to vector<8x8x1xf32>
    %84 = vector.broadcast %83 : vector<8x8x1xf32> to vector<8x8x8xf32>
    %85 = arith.divf %81, %84 : vector<8x8x8xf32>
    "tpu.trace_start"() <{level = 10 : i32, message = "bqk,bkd->bqd"}> : () -> ()
    %cst_40 = arith.constant dense<0.000000e+00> : vector<8x8x8xf32>
    %86 = tpu.matmul %85, %73, %cst_40 {dimension_numbers = #tpu.dot_dimension_numbers<[2], [1], [1], [2], [0, 0, 0, 1, 1, 2], [0], [0]>} : vector<8x8x8xf32>, vector<8x8x8xf32>, vector<8x8x8xf32> -> vector<8x8x8xf32>
    %cst_41 = arith.constant 0.000000e+00 : f32
    "tpu.trace_stop"() : () -> ()
    %87 = vector.broadcast %cst_41 : f32 to vector<16x32xf32>
    %88 = vector.extract_strided_slice %86 {offsets = [0, 0, 0], sizes = [2, 8, 8], strides = [1, 1, 1]} : vector<8x8x8xf32> to vector<2x8x8xf32>
    %89 = vector.shape_cast %88 : vector<2x8x8xf32> to vector<16x8xf32>
    %c0_42 = arith.constant 0 : index
    %c0_43 = arith.constant 0 : index
    %90 = vector.load %arg10[%c0_42, %c0_43] : memref<32x32xf32, #tpu.memory_space<vmem>>, vector<8x32xf32>
    %cst_44 = arith.constant dense<0.000000e+00> : vector<16x32xf32>
    %91 = tpu.matmul %89, %90, %cst_44 {dimension_numbers = #tpu.dot_dimension_numbers<[1], [0], [0], [1], [0, 0, 1, 1], [], []>} : vector<16x8xf32>, vector<8x32xf32>, vector<16x32xf32> -> vector<16x32xf32>
    %92 = arith.addf %87, %91 : vector<16x32xf32>
    %93 = vector.extract_strided_slice %86 {offsets = [2, 0, 0], sizes = [2, 8, 8], strides = [1, 1, 1]} : vector<8x8x8xf32> to vector<2x8x8xf32>
    %94 = vector.shape_cast %93 : vector<2x8x8xf32> to vector<16x8xf32>
    %c8 = arith.constant 8 : index
    %c0_45 = arith.constant 0 : index
    %95 = vector.load %arg10[%c8, %c0_45] : memref<32x32xf32, #tpu.memory_space<vmem>>, vector<8x32xf32>
    %cst_46 = arith.constant dense<0.000000e+00> : vector<16x32xf32>
    %96 = tpu.matmul %94, %95, %cst_46 {dimension_numbers = #tpu.dot_dimension_numbers<[1], [0], [0], [1], [0, 0, 1, 1], [], []>} : vector<16x8xf32>, vector<8x32xf32>, vector<16x32xf32> -> vector<16x32xf32>
    %97 = arith.addf %92, %96 : vector<16x32xf32>
    %98 = vector.extract_strided_slice %86 {offsets = [4, 0, 0], sizes = [2, 8, 8], strides = [1, 1, 1]} : vector<8x8x8xf32> to vector<2x8x8xf32>
    %99 = vector.shape_cast %98 : vector<2x8x8xf32> to vector<16x8xf32>
    %c16 = arith.constant 16 : index
    %c0_47 = arith.constant 0 : index
    %100 = vector.load %arg10[%c16, %c0_47] : memref<32x32xf32, #tpu.memory_space<vmem>>, vector<8x32xf32>
    %cst_48 = arith.constant dense<0.000000e+00> : vector<16x32xf32>
    %101 = tpu.matmul %99, %100, %cst_48 {dimension_numbers = #tpu.dot_dimension_numbers<[1], [0], [0], [1], [0, 0, 1, 1], [], []>} : vector<16x8xf32>, vector<8x32xf32>, vector<16x32xf32> -> vector<16x32xf32>
    %102 = arith.addf %97, %101 : vector<16x32xf32>
    %103 = vector.extract_strided_slice %86 {offsets = [6, 0, 0], sizes = [2, 8, 8], strides = [1, 1, 1]} : vector<8x8x8xf32> to vector<2x8x8xf32>
    %104 = vector.shape_cast %103 : vector<2x8x8xf32> to vector<16x8xf32>
    %c24 = arith.constant 24 : index
    %c0_49 = arith.constant 0 : index
    %105 = vector.load %arg10[%c24, %c0_49] : memref<32x32xf32, #tpu.memory_space<vmem>>, vector<8x32xf32>
    %cst_50 = arith.constant dense<0.000000e+00> : vector<16x32xf32>
    %106 = tpu.matmul %104, %105, %cst_50 {dimension_numbers = #tpu.dot_dimension_numbers<[1], [0], [0], [1], [0, 0, 1, 1], [], []>} : vector<16x8xf32>, vector<8x32xf32>, vector<16x32xf32> -> vector<16x32xf32>
    %107 = arith.addf %102, %106 : vector<16x32xf32>
    %c0_51 = arith.constant 0 : index
    %c0_52 = arith.constant 0 : index
    %108 = vector.load %arg11[%c0_51, %c0_52] : memref<1x32xf32, #tpu.memory_space<vmem>>, vector<1x32xf32>
    %109 = vector.broadcast %108 : vector<1x32xf32> to vector<16x32xf32>
    %110 = arith.addf %107, %109 : vector<16x32xf32>
    %cst_53 = arith.constant 0.000000e+00 : f32
    %111 = vector.broadcast %cst_53 : f32 to vector<16x32xf32>
    %112 = arith.maximumf %110, %111 : vector<16x32xf32>
    %113 = arith.addf %112, %25 : vector<16x32xf32>
    %c0_54 = arith.constant 0 : index
    %c0_55 = arith.constant 0 : index
    %114 = vector.load %arg12[%c0_54, %c0_55] : memref<32x128xf32, #tpu.memory_space<vmem>>, vector<32x128xf32>
    %cst_56 = arith.constant dense<0.000000e+00> : vector<16x128xf32>
    %115 = tpu.matmul %113, %114, %cst_56 {dimension_numbers = #tpu.dot_dimension_numbers<[1], [0], [0], [1], [0, 0, 1, 1], [], []>} : vector<16x32xf32>, vector<32x128xf32>, vector<16x128xf32> -> vector<16x128xf32>
    %c0_57 = arith.constant 0 : index
    %c0_58 = arith.constant 0 : index
    %116 = vector.load %arg13[%c0_57, %c0_58] : memref<1x128xf32, #tpu.memory_space<vmem>>, vector<1x128xf32>
    %117 = vector.broadcast %116 : vector<1x128xf32> to vector<16x128xf32>
    %118 = arith.addf %115, %117 : vector<16x128xf32>
    %cst_59 = arith.constant 0.000000e+00 : f32
    %119 = vector.broadcast %cst_59 : f32 to vector<16x128xf32>
    %120 = arith.maximumf %118, %119 : vector<16x128xf32>
    %c0_60 = arith.constant 0 : index
    %c0_61 = arith.constant 0 : index
    %121 = vector.load %arg14[%c0_60, %c0_61] : memref<128x32xf32, #tpu.memory_space<vmem>>, vector<128x32xf32>
    %cst_62 = arith.constant dense<0.000000e+00> : vector<16x32xf32>
    %122 = tpu.matmul %120, %121, %cst_62 {dimension_numbers = #tpu.dot_dimension_numbers<[1], [0], [0], [1], [0, 0, 1, 1], [], []>} : vector<16x128xf32>, vector<128x32xf32>, vector<16x32xf32> -> vector<16x32xf32>
    %c0_63 = arith.constant 0 : index
    %c0_64 = arith.constant 0 : index
    %123 = vector.load %arg15[%c0_63, %c0_64] : memref<1x32xf32, #tpu.memory_space<vmem>>, vector<1x32xf32>
    %124 = vector.broadcast %123 : vector<1x32xf32> to vector<16x32xf32>
    %125 = arith.addf %122, %124 : vector<16x32xf32>
    %cst_65 = arith.constant 0.000000e+00 : f32
    %126 = vector.broadcast %cst_65 : f32 to vector<16x32xf32>
    %127 = arith.maximumf %125, %126 : vector<16x32xf32>
    %c0_66 = arith.constant 0 : index
    %c0_67 = arith.constant 0 : index
    %128 = vector.load %arg16[%c0_66, %c0_67] : memref<1x32xf32, #tpu.memory_space<vmem>>, vector<1x32xf32>
    %c0_68 = arith.constant 0 : index
    %c0_69 = arith.constant 0 : index
    %129 = vector.load %arg17[%c0_68, %c0_69] : memref<1x32xf32, #tpu.memory_space<vmem>>, vector<1x32xf32>
    %cst_70 = arith.constant dense<0.000000e+00> : vector<16xf32>
    %130 = vector.multi_reduction <add>, %127, %cst_70 [1] : vector<16x32xf32> to vector<16xf32>
    %131 = vector.shape_cast %130 : vector<16xf32> to vector<16x1xf32>
    %cst_71 = arith.constant 3.200000e+01 : f32
    %132 = vector.broadcast %cst_71 : f32 to vector<16x1xf32>
    %133 = arith.divf %131, %132 : vector<16x1xf32>
    %134 = vector.broadcast %133 : vector<16x1xf32> to vector<16x32xf32>
    %135 = arith.subf %127, %134 : vector<16x32xf32>
    %136 = arith.mulf %135, %135 : vector<16x32xf32>
    %cst_72 = arith.constant dense<0.000000e+00> : vector<16xf32>
    %137 = vector.multi_reduction <add>, %136, %cst_72 [1] : vector<16x32xf32> to vector<16xf32>
    %138 = vector.shape_cast %137 : vector<16xf32> to vector<16x1xf32>
    %cst_73 = arith.constant 3.200000e+01 : f32
    %139 = vector.broadcast %cst_73 : f32 to vector<16x1xf32>
    %140 = arith.divf %138, %139 : vector<16x1xf32>
    %141 = vector.broadcast %133 : vector<16x1xf32> to vector<16x32xf32>
    %142 = arith.subf %127, %141 : vector<16x32xf32>
    %cst_74 = arith.constant 9.99999974E-6 : f32
    %143 = vector.broadcast %cst_74 : f32 to vector<16x1xf32>
    %144 = arith.addf %140, %143 : vector<16x1xf32>
    %145 = math.rsqrt %144 : vector<16x1xf32>
    %146 = vector.broadcast %145 : vector<16x1xf32> to vector<16x32xf32>
    %147 = arith.mulf %142, %146 : vector<16x32xf32>
    %148 = vector.broadcast %128 : vector<1x32xf32> to vector<16x32xf32>
    %149 = arith.mulf %147, %148 : vector<16x32xf32>
    %150 = vector.broadcast %129 : vector<1x32xf32> to vector<16x32xf32>
    %151 = arith.addf %149, %150 : vector<16x32xf32>
    %152 = vector.shape_cast %151 : vector<16x32xf32> to vector<2x8x32xf32>
    %c0_75 = arith.constant 0 : index
    %c0_76 = arith.constant 0 : index
    %c0_77 = arith.constant 0 : index
    %153 = vector.load %arg18[%c0_75, %c0_76, %c0_77] : memref<2x8x32xf32, #tpu.memory_space<vmem>>, vector<2x8x32xf32>
    tpu.vector_store %arg18[%c0_75, %c0_76, %c0_77], %152 {strides = array<i32>} : memref<2x8x32xf32, #tpu.memory_space<vmem>>, vector<2x8x32xf32>,
    return
  }
  func.func @transform_0(%arg0: i32) -> (i32, i32, i32) {
    %c0_i32 = arith.constant 0 : i32
    %c0_i32_0 = arith.constant 0 : i32
    %c0_i32_1 = arith.constant 0 : i32
    return %arg0, %c0_i32, %c0_i32_0 : i32, i32, i32
  }
  func.func @transform_1(%arg0: i32) -> (i32, i32, i32) {
    %c0_i32 = arith.constant 0 : i32
    %c0_i32_0 = arith.constant 0 : i32
    %c0_i32_1 = arith.constant 0 : i32
    return %arg0, %c0_i32, %c0_i32_0 : i32, i32, i32
  }
  func.func @transform_2(%arg0: i32) -> (i32, i32, i32) {
    %c0_i32 = arith.constant 0 : i32
    %c0_i32_0 = arith.constant 0 : i32
    %c0_i32_1 = arith.constant 0 : i32
    return %arg0, %c0_i32, %c0_i32_0 : i32, i32, i32
  }
  func.func @transform_3(%arg0: i32) -> (i32, i32) {
    %c0_i32 = arith.constant 0 : i32
    %c0_i32_0 = arith.constant 0 : i32
    %c0_i32_1 = arith.constant 0 : i32
    return %c0_i32, %c0_i32_0 : i32, i32
  }
  func.func @transform_4(%arg0: i32) -> (i32, i32) {
    %c0_i32 = arith.constant 0 : i32
    %c0_i32_0 = arith.constant 0 : i32
    %c0_i32_1 = arith.constant 0 : i32
    return %c0_i32, %c0_i32_0 : i32, i32
  }
  func.func @transform_5(%arg0: i32) -> (i32, i32) {
    %c0_i32 = arith.constant 0 : i32
    %c0_i32_0 = arith.constant 0 : i32
    %c0_i32_1 = arith.constant 0 : i32
    return %c0_i32, %c0_i32_0 : i32, i32
  }
  func.func @transform_6(%arg0: i32) -> (i32, i32) {
    %c0_i32 = arith.constant 0 : i32
    %c0_i32_0 = arith.constant 0 : i32
    %c0_i32_1 = arith.constant 0 : i32
    return %c0_i32, %c0_i32_0 : i32, i32
  }
  func.func @transform_7(%arg0: i32) -> (i32, i32) {
    %c0_i32 = arith.constant 0 : i32
    %c0_i32_0 = arith.constant 0 : i32
    %c0_i32_1 = arith.constant 0 : i32
    return %c0_i32, %c0_i32_0 : i32, i32
  }
  func.func @transform_8(%arg0: i32) -> (i32, i32) {
    %c0_i32 = arith.constant 0 : i32
    %c0_i32_0 = arith.constant 0 : i32
    %c0_i32_1 = arith.constant 0 : i32
    return %c0_i32, %c0_i32_0 : i32, i32
  }
  func.func @transform_9(%arg0: i32) -> (i32, i32) {
    %c0_i32 = arith.constant 0 : i32
    %c0_i32_0 = arith.constant 0 : i32
    %c0_i32_1 = arith.constant 0 : i32
    return %c0_i32, %c0_i32_0 : i32, i32
  }
  func.func @transform_10(%arg0: i32) -> (i32, i32) {
    %c0_i32 = arith.constant 0 : i32
    %c0_i32_0 = arith.constant 0 : i32
    %c0_i32_1 = arith.constant 0 : i32
    return %c0_i32, %c0_i32_0 : i32, i32
  }
  func.func @transform_11(%arg0: i32) -> (i32, i32) {
    %c0_i32 = arith.constant 0 : i32
    %c0_i32_0 = arith.constant 0 : i32
    %c0_i32_1 = arith.constant 0 : i32
    return %c0_i32, %c0_i32_0 : i32, i32
  }
  func.func @transform_12(%arg0: i32) -> (i32, i32) {
    %c0_i32 = arith.constant 0 : i32
    %c0_i32_0 = arith.constant 0 : i32
    %c0_i32_1 = arith.constant 0 : i32
    return %c0_i32, %c0_i32_0 : i32, i32
  }
  func.func @transform_13(%arg0: i32) -> (i32, i32) {
    %c0_i32 = arith.constant 0 : i32
    %c0_i32_0 = arith.constant 0 : i32
    %c0_i32_1 = arith.constant 0 : i32
    return %c0_i32, %c0_i32_0 : i32, i32
  }
  func.func @transform_14(%arg0: i32) -> (i32, i32) {
    %c0_i32 = arith.constant 0 : i32
    %c0_i32_0 = arith.constant 0 : i32
    %c0_i32_1 = arith.constant 0 : i32
    return %c0_i32, %c0_i32_0 : i32, i32
  }
  func.func @transform_15(%arg0: i32) -> (i32, i32) {
    %c0_i32 = arith.constant 0 : i32
    %c0_i32_0 = arith.constant 0 : i32
    %c0_i32_1 = arith.constant 0 : i32
    return %c0_i32, %c0_i32_0 : i32, i32
  }
  func.func @transform_16(%arg0: i32) -> (i32, i32) {
    %c0_i32 = arith.constant 0 : i32
    %c0_i32_0 = arith.constant 0 : i32
    %c0_i32_1 = arith.constant 0 : i32
    return %c0_i32, %c0_i32_0 : i32, i32
  }
  func.func @transform_17(%arg0: i32) -> (i32, i32, i32) {
    %c0_i32 = arith.constant 0 : i32
    %c0_i32_0 = arith.constant 0 : i32
    %c0_i32_1 = arith.constant 0 : i32
    return %arg0, %c0_i32, %c0_i32_0 : i32, i32, i32
  }
  func.func @transform_18(%arg0: i32) -> (i32, i32, i32) {
    %c0_i32 = arith.constant 0 : i32
    %c0_i32_0 = arith.constant 0 : i32
    %c0_i32_1 = arith.constant 0 : i32
    return %arg0, %c0_i32, %c0_i32_0 : i32, i32, i32
  }
  func.func @transform_19(%arg0: i32) -> (i32, i32, i32) {
    %c0_i32 = arith.constant 0 : i32
    %c0_i32_0 = arith.constant 0 : i32
    %c0_i32_1 = arith.constant 0 : i32
    return %arg0, %c0_i32, %c0_i32_0 : i32, i32, i32
  }
  func.func @transform_20(%arg0: i32) -> (i32, i32, i32) {
    %c0_i32 = arith.constant 0 : i32
    %c0_i32_0 = arith.constant 0 : i32
    %c0_i32_1 = arith.constant 0 : i32
    return %arg0, %c0_i32, %c0_i32_0 : i32, i32, i32
  }
}

</mosaic_0001>

<llo_original>
// kernel: tpu_custom_call.1
$region0: #{tpu_custom_call.1}
  #allocation0 [shape = 'u32[]', space=smem, size = 0x4, offset = 0x4, fixed_abs, tag = 'smem constant byte address 0x4 - core index']
  #allocation1 [shape = 'u32[144,128]{1,0:T(1,128)}', space=vmem, size = 0x12000, scoped, tag = 'internal scratch']
  %s0 = inlined_call_operand.vmem [shape: f32[2,8,32], index: 0, kind: input, shape index: {}]
  %s1 = inlined_call_operand.vmem [shape: f32[2,8,1], index: 1, kind: input, shape index: {}]
  %s2 = inlined_call_operand.vmem [shape: f32[2,1,8], index: 2, kind: input, shape index: {}]
  %s3 = inlined_call_operand.vmem [shape: f32[1,32], index: 3, kind: input, shape index: {}]
  %s4 = inlined_call_operand.vmem [shape: f32[1,32], index: 4, kind: input, shape index: {}]
  %s5 = inlined_call_operand.vmem [shape: f32[32,96], index: 5, kind: input, shape index: {}]
  %s6 = inlined_call_operand.vmem [shape: f32[1,96], index: 6, kind: input, shape index: {}]
  %s7 = inlined_call_operand.vmem [shape: f32[1,32], index: 7, kind: input, shape index: {}]
  %s8 = inlined_call_operand.vmem [shape: f32[1,32], index: 8, kind: input, shape index: {}]
  %s9 = inlined_call_operand.vmem [shape: f32[32,32], index: 9, kind: input, shape index: {}]
  %s10 = inlined_call_operand.vmem [shape: f32[1,32], index: 10, kind: input, shape index: {}]
  %s11 = inlined_call_operand.vmem [shape: f32[32,128], index: 11, kind: input, shape index: {}]
  %s12 = inlined_call_operand.vmem [shape: f32[1,128], index: 12, kind: input, shape index: {}]
  %s13 = inlined_call_operand.vmem [shape: f32[128,32], index: 13, kind: input, shape index: {}]
  %s14 = inlined_call_operand.vmem [shape: f32[1,32], index: 14, kind: input, shape index: {}]
  %s15 = inlined_call_operand.vmem [shape: f32[1,32], index: 15, kind: input, shape index: {}]
  %s16 = inlined_call_operand.vmem [shape: f32[1,32], index: 16, kind: input, shape index: {}]
  %s17 = inlined_call_operand.hbm [shape: f32[2,8,32], index: 17, kind: output, shape index: {0}]
  %s18 = inlined_call_operand.hbm [shape: f32[2,8,32], index: 18, kind: output, shape index: {1}]
  %s19 = inlined_call_operand.hbm [shape: f32[2,8,32], index: 19, kind: output, shape index: {2}]
  %s20 = inlined_call_operand.hbm [shape: f32[2,8,32], index: 20, kind: output, shape index: {3}]
  %21 = xla_tuple %s17, %s18, %s19, %s20
  %s22 = sld [smem:[#allocation0]]
  $region102: #{tpu_custom_call.1} parent=0
    _
  %s24 = ssub.s32 1, %s22
  %s25 = scalar_select 0, %s24, %s22
  $region1: #{tpu_custom_call.1} parent=0
    #allocation2 [shape = 'u8[8192]{0}', space=vmem, size = 0x2000, scoped, tag = 'output window, operand 0, single buffered']
    #allocation3 [shape = 's32[1]{0}', space=sflag, size = 0x4, scoped, tag = 'scoped memory for tpu_custom_call.1']
    #allocation4 [shape = 'u8[8192]{0}', space=vmem, size = 0x2000, scoped, tag = 'output window, operand 1, single buffered']
    #allocation5 [shape = 's32[1]{0}', space=sflag, size = 0x4, scoped, tag = 'scoped memory for tpu_custom_call.1']
    #allocation6 [shape = 'u8[8192]{0}', space=vmem, size = 0x2000, scoped, tag = 'output window, operand 2, single buffered']
    #allocation7 [shape = 'u8[8192]{0}', space=vmem, size = 0x2000, scoped, tag = 'output window, operand 3, single buffered']
    #allocation8 [shape = 's32[1]{0}', space=sflag, size = 0x4, scoped, tag = 'scoped memory for tpu_custom_call.1']
    %26 = vsyncpa [#allocation3], 0
    %27 = vsyncpa [#allocation5], 0
    %28 = vsyncpa [#allocation8], 0
    // Predicated region
    $region2: #{tpu_custom_call.1} parent=1 // pred_check
      _
    $region3: #{tpu_custom_call.1} parent=1 // pred_check_branch
      %30 = sbr.rel (0) target = $region5
    $region4: #{tpu_custom_call.1} parent=1 // pred_region
      _
    $region5: #{tpu_custom_call.1} parent=1 // pred_fallthru
      _
    // Predicated region
    $region6: #{tpu_custom_call.1} parent=1 // pred_check
      _
    $region7: #{tpu_custom_call.1} parent=1 // pred_check_branch
      %32 = sbr.rel (0) target = $region9
    $region8: #{tpu_custom_call.1} parent=1 // pred_region
      _
    $region9: #{tpu_custom_call.1} parent=1 // pred_fallthru
      _
    // Predicated region
    $region10: #{tpu_custom_call.1} parent=1 // pred_check
      _
    $region11: #{tpu_custom_call.1} parent=1 // pred_check_branch
      %34 = sbr.rel (0) target = $region13
    $region12: #{tpu_custom_call.1} parent=1 // pred_region
      _
    $region13: #{tpu_custom_call.1} parent=1 // pred_fallthru
      _
    // Predicated region
    $region14: #{tpu_custom_call.1} parent=1 // pred_check
      _
    $region15: #{tpu_custom_call.1} parent=1 // pred_check_branch
      %36 = sbr.rel (0) target = $region17
    $region16: #{tpu_custom_call.1} parent=1 // pred_region
      _
    $region17: #{tpu_custom_call.1} parent=1 // pred_fallthru
      _
    // Predicated region
    $region18: #{tpu_custom_call.1} parent=1 // pred_check
      _
    $region19: #{tpu_custom_call.1} parent=1 // pred_check_branch
      %38 = sbr.rel (0) target = $region21
    $region20: #{tpu_custom_call.1} parent=1 // pred_region
      _
    $region21: #{tpu_custom_call.1} parent=1 // pred_fallthru
      _
    // Predicated region
    $region22: #{tpu_custom_call.1} parent=1 // pred_check
      _
    $region23: #{tpu_custom_call.1} parent=1 // pred_check_branch
      %40 = sbr.rel (0) target = $region25
    $region24: #{tpu_custom_call.1} parent=1 // pred_region
      _
    $region25: #{tpu_custom_call.1} parent=1 // pred_fallthru
      _
    // Predicated region
    $region26: #{tpu_custom_call.1} parent=1 // pred_check
      _
    $region27: #{tpu_custom_call.1} parent=1 // pred_check_branch
      %42 = sbr.rel (0) target = $region29
    $region28: #{tpu_custom_call.1} parent=1 // pred_region
      _
    $region29: #{tpu_custom_call.1} parent=1 // pred_fallthru
      _
    // Predicated region
    $region30: #{tpu_custom_call.1} parent=1 // pred_check
      _
    $region31: #{tpu_custom_call.1} parent=1 // pred_check_branch
      %44 = sbr.rel (0) target = $region33
    $region32: #{tpu_custom_call.1} parent=1 // pred_region
      _
    $region33: #{tpu_custom_call.1} parent=1 // pred_fallthru
      _
    // Predicated region
    $region34: #{tpu_custom_call.1} parent=1 // pred_check
      _
    $region35: #{tpu_custom_call.1} parent=1 // pred_check_branch
      %46 = sbr.rel (0) target = $region37
    $region36: #{tpu_custom_call.1} parent=1 // pred_region
      _
    $region37: #{tpu_custom_call.1} parent=1 // pred_fallthru
      _
    // Predicated region
    $region38: #{tpu_custom_call.1} parent=1 // pred_check
      _
    $region39: #{tpu_custom_call.1} parent=1 // pred_check_branch
      %48 = sbr.rel (0) target = $region41
    $region40: #{tpu_custom_call.1} parent=1 // pred_region
      _
    $region41: #{tpu_custom_call.1} parent=1 // pred_fallthru
      _
    // Predicated region
    $region42: #{tpu_custom_call.1} parent=1 // pred_check
      _
    $region43: #{tpu_custom_call.1} parent=1 // pred_check_branch
      %50 = sbr.rel (0) target = $region45
    $region44: #{tpu_custom_call.1} parent=1 // pred_region
      _
    $region45: #{tpu_custom_call.1} parent=1 // pred_fallthru
      _
    // Predicated region
    $region46: #{tpu_custom_call.1} parent=1 // pred_check
      _
    $region47: #{tpu_custom_call.1} parent=1 // pred_check_branch
      %52 = sbr.rel (0) target = $region49
    $region48: #{tpu_custom_call.1} parent=1 // pred_region
      _
    $region49: #{tpu_custom_call.1} parent=1 // pred_fallthru
      _
    // Predicated region
    $region50: #{tpu_custom_call.1} parent=1 // pred_check
      _
    $region51: #{tpu_custom_call.1} parent=1 // pred_check_branch
      %54 = sbr.rel (0) target = $region53
    $region52: #{tpu_custom_call.1} parent=1 // pred_region
      _
    $region53: #{tpu_custom_call.1} parent=1 // pred_fallthru
      _
    // Predicated region
    $region54: #{tpu_custom_call.1} parent=1 // pred_check
      _
    $region55: #{tpu_custom_call.1} parent=1 // pred_check_branch
      %56 = sbr.rel (0) target = $region57
    $region56: #{tpu_custom_call.1} parent=1 // pred_region
      _
    $region57: #{tpu_custom_call.1} parent=1 // pred_fallthru
      _
    // Predicated region
    $region58: #{tpu_custom_call.1} parent=1 // pred_check
      _
    $region59: #{tpu_custom_call.1} parent=1 // pred_check_branch
      %58 = sbr.rel (0) target = $region61
    $region60: #{tpu_custom_call.1} parent=1 // pred_region
      _
    $region61: #{tpu_custom_call.1} parent=1 // pred_fallthru
      _
    // Predicated region
    $region62: #{tpu_custom_call.1} parent=1 // pred_check
      _
    $region63: #{tpu_custom_call.1} parent=1 // pred_check_branch
      %60 = sbr.rel (0) target = $region65
    $region64: #{tpu_custom_call.1} parent=1 // pred_region
      _
    $region65: #{tpu_custom_call.1} parent=1 // pred_fallthru
      _
    // Predicated region
    $region66: #{tpu_custom_call.1} parent=1 // pred_check
      _
    $region67: #{tpu_custom_call.1} parent=1 // pred_check_branch
      %62 = sbr.rel (0) target = $region69
    $region68: #{tpu_custom_call.1} parent=1 // pred_region
      _
    $region69: #{tpu_custom_call.1} parent=1 // pred_fallthru
      _
    %v63 = vld [vmem:[%s0] sm:$0xff]
    %v64 = vld [vmem:[%s0 + $0x8] sm:$0xff]
    %v65 = vld [vmem:[%s3] sm:$0x1]
    %v66 = vld [vmem:[%s4] sm:$0x1]
    %vm67 = vcmask 261120
    %v68 = vsel %vm67, %v63, 0.0
    %69 = vadd.xlane.f32.xlu0 %v68
    %v70 = vpop.xlane.xlu0 %69
    %v71 = vsel %vm67, %v64, 0.0
    %72 = vadd.xlane.f32.xlu0 %v71
    %v73 = vpop.xlane.xlu0 %72
    %v74 = vrcp.pop 32.0
    %v75 = vmul.f32 %v70, %v74
    %v76 = vmul.f32 %v73, %v74
    %v77 = vsub.f32 %v63, %v75
    %v78 = vsub.f32 %v64, %v76
    %v79 = vmul.f32 %v77, %v77
    %v80 = vmul.f32 %v78, %v78
    %v81 = vsel %vm67, %v79, 0.0
    %82 = vadd.xlane.f32.xlu0 %v81
    %v83 = vpop.xlane.xlu0 %82
    %v84 = vsel %vm67, %v80, 0.0
    %85 = vadd.xlane.f32.xlu0 %v84
    %v86 = vpop.xlane.xlu0 %85
    %v87 = vmul.f32 %v83, %v74
    %v88 = vmul.f32 %v86, %v74
    %v89 = vadd.f32 %v87, 1e-05
    %v90 = vadd.f32 %v88, 1e-05
    %v91 = vrsqrt.pop %v89
    %v92 = vrsqrt.pop %v90
    %v93 = vmul.f32 %v77, %v91
    %v94 = vmul.f32 %v78, %v92
    %v96 = vlaneseq
    %v97 = vshrl.u32 %v96, 7
    %v98 = vsub.s32 0, %v97
    %v99 = vrot.slane %v65, %v98
    %v101 = vmul.f32 %v93, %v99
    %v102 = vmul.f32 %v94, %v99
    %v104 = vlaneseq
    %v105 = vshrl.u32 %v104, 7
    %v106 = vsub.s32 0, %v105
    %v107 = vrot.slane %v66, %v106
    %v109 = vadd.f32 %v101, %v107
    %v110 = vadd.f32 %v102, %v107
    %v111 = vld [vmem:[%s5] sm:$0xff]
    %v112 = vld [vmem:[%s5 + $0x8] sm:$0xff]
    %v113 = vld [vmem:[%s5 + $0x10] sm:$0xff]
    %v114 = vld [vmem:[%s5 + $0x18] sm:$0xff]
    %v115 = vld [vmem:[%s6] sm:$0x1]
    %v117 = vlaneseq
    %v118 = vshrl.u32 %v117, 7
    %v119 = vsub.s32 0, %v118
    %v120 = vrot.slane %v115, %v119
    %v123 = vsel %vm67, %v109, 0
    %v126 = vsel %vm67, %v110, 0
    %128 = vmatprep.subr.mxu0 0.0
    %129 = vmatpush1.msra.mxu0 %v111
    %130 = vmatprep.subr.mxu0 0.0
    %131 = vmatpush1.msra.mxu0 %v112
    %132 = vmatprep.subr.mxu0 0.0
    %133 = vmatpush1.msra.mxu0 %v113
    %134 = vmatprep.subr.mxu0 0.0
    %135 = vmatpush1.msra.mxu0 %v114
    %136 = vmatprep.subr.mxu0 0.0
    %137 = vmatpush1.msra.mxu0 0.0
    %138 = vmatprep.subr.mxu0 0.0
    %139 = vmatpush1.msra.mxu0 0.0
    %140 = vmatprep.subr.mxu0 0.0
    %141 = vmatpush1.msra.mxu0 0.0
    %142 = vmatprep.subr.mxu0 0.0
    %143 = vmatpush1.msra.mxu0 0.0
    %144 = vmatprep.subr.mxu0 0.0
    %145 = vmatpush1.msra.mxu0 0.0
    %146 = vmatprep.subr.mxu0 0.0
    %147 = vmatpush1.msra.mxu0 0.0
    %148 = vmatprep.subr.mxu0 0.0
    %149 = vmatpush1.msra.mxu0 0.0
    %150 = vmatprep.subr.mxu0 0.0
    %151 = vmatpush1.msra.mxu0 0.0
    %152 = vmatprep.subr.mxu0 0.0
    %153 = vmatpush1.msra.mxu0 0.0
    %154 = vmatprep.subr.mxu0 0.0
    %155 = vmatpush1.msra.mxu0 0.0
    %156 = vmatprep.subr.mxu0 0.0
    %157 = vmatpush1.msra.mxu0 0.0
    %158 = vmatprep.subr.mxu0 0.0
    %159 = vmatpush1.msra.mxu0 0.0
    %160 = vmatprep.subr.mxu0 0.0
    %161 = vmatpush1.msra.mxu0 0.0
    %162 = vmatprep.subr.mxu0 0.0
    %163 = vmatpush1.msra.mxu0 0.0
    %164 = vmatprep.subr.mxu0 0.0
    %165 = vmatpush1.msra.mxu0 0.0
    %166 = vmatprep.subr.mxu0 0.0
    %167 = vmatpush1.msra.mxu0 0.0
    %168 = vmatprep.subr.mxu0 0.0
    %169 = vmatpush1.msra.mxu0 0.0
    %170 = vmatprep.subr.mxu0 0.0
    %171 = vmatpush1.msra.mxu0 0.0
    %172 = vmatprep.subr.mxu0 0.0
    %173 = vmatpush1.msra.mxu0 0.0
    %174 = vmatprep.subr.mxu0 0.0
    %175 = vmatpush1.msra.mxu0 0.0
    %176 = vmatprep.subr.mxu0 0.0
    %177 = vmatpush1.msra.mxu0 0.0
    %178 = vmatprep.subr.mxu0 0.0
    %179 = vmatpush1.msra.mxu0 0.0
    %180 = vmatprep.subr.mxu0 0.0
    %181 = vmatpush1.msra.mxu0 0.0
    %182 = vmatprep.subr.mxu0 0.0
    %183 = vmatpush1.msra.mxu0 0.0
    %184 = vmatprep.subr.mxu0 0.0
    %185 = vmatpush1.msra.mxu0 0.0
    %186 = vmatprep.subr.mxu0 0.0
    %187 = vmatpush1.msra.mxu0 0.0
    %188 = vmatprep.subr.mxu0 0.0
    %189 = vmatpush1.msra.mxu0 0.0
    %190 = vmatprep.subr.mxu0 0.0
    %191 = vmatpush1.msra.mxu0 0.0
    %192 = vmatprep.mubr.f32.mxu0 0.0
    %193 = vmatmul.mubr.f32.gmra.mrb[0].mxu0 %v123
    %v194 = vpop.f32.mrb[0].mxu0
    %v195 = vadd.f32 %v120, %v194
    %v196 = vpop.f32.mrb[0].mxu0
    %197 = vmatprep.mubr.f32.mxu0 0.0
    %198 = vmatmul.mubr.f32.gmra.mrb[0].mxu0 %v126
    %v199 = vpop.f32.mrb[0].mxu0
    %v200 = vadd.f32 %v120, %v199
    %v201 = vpop.f32.mrb[0].mxu0
    %202 = vdwg.mxu0
    %v203 = vmax.f32 %v195, 0.0
    %v204 = vmax.f32 %v200, 0.0
    %v205 = vld [vmem:[%s7] sm:$0x1]
    %v207 = vlaneseq
    %v208 = vshrl.u32 %v207, 7
    %v209 = vsub.s32 0, %v208
    %v210 = vrot.slane %v205, %v209
    %211 = vrot.lane.b32.xlu0 %v210, 64
    %v212 = vpop.permute.xlu0 %211
    %v214 = vmul.f32 %v203, %v212
    %v215 = vmul.f32 %v204, %v212
    %v216 = vld [vmem:[%s8] sm:$0x1]
    %v218 = vlaneseq
    %v219 = vshrl.u32 %v218, 7
    %v220 = vsub.s32 0, %v219
    %v221 = vrot.slane %v216, %v220
    %222 = vrot.lane.b32.xlu0 %v221, 64
    %v223 = vpop.permute.xlu0 %222
    %v225 = vmul.f32 %v203, %v223
    %v226 = vmul.f32 %v204, %v223
    %229 = vrot.lane.b32.xlu0 %v214, 64
    %v230 = vpop.permute.xlu0 %229
    %231 = vrot.lane.b32.xlu0 %v215, 64
    %v232 = vpop.permute.xlu0 %231
    %235 = vst.msk [vmem:[#allocation4] sm:$0xff] %vm67, %v230
    %236 = vst.msk [vmem:[#allocation4 + $0x8] sm:$0xff] %vm67, %v232
    %237 = vst.msk [vmem:[#allocation6] sm:$0xff] %vm67, %v203
    %238 = vst.msk [vmem:[#allocation6 + $0x8] sm:$0xff] %vm67, %v204
    %241 = vrot.lane.b32.xlu0 %v203, 96
    %v242 = vpop.permute.xlu0 %241
    %243 = vrot.lane.b32.xlu0 %v204, 96
    %v244 = vpop.permute.xlu0 %243
    %247 = vst.msk [vmem:[#allocation7] sm:$0xff] %vm67, %v242
    %248 = vst.msk [vmem:[#allocation7 + $0x8] sm:$0xff] %vm67, %v244
    %v249 = vld [vmem:[%s1] sm:$0xff]
    %v250 = vld [vmem:[%s1 + $0x8] sm:$0xff]
    %v251 = vld [vmem:[%s2] sm:$0x1]
    %v252 = vld [vmem:[%s2 + $0x1] sm:$0x1]
    %254 = vset.pattern.permute.xlu0 0
    %255 = vperm.xlu0 %254, %v249
    %v256 = vpop.permute.xlu0 %255
    %259 = vset.pattern.permute.xlu0 0
    %260 = vperm.xlu0 %259, %v250
    %v261 = vpop.permute.xlu0 %260
    %v265 = vlaneseq
    %v266 = vshrl.u32 %v265, 7
    %v267 = vsub.s32 0, %v266
    %v268 = vrot.slane %v251, %v267
    %v269 = vlaneseq
    %v270 = vshrl.u32 %v269, 7
    %v271 = vsub.s32 0, %v270
    %v272 = vrot.slane %v252, %v271
    %v275 = vmul.f32 %v256, %v268
    %v276 = vmul.f32 %v261, %v272
    %vm277 = vcmp.gt.f32.partialorder %v275, 0.5
    %vm278 = vcmp.gt.f32.partialorder %v276, 0.5
    %281 = vrot.lane.b32.xlu0 %v225, 120
    %v282 = vpop.permute.xlu0 %281
    %283 = vrot.lane.b32.xlu0 %v226, 120
    %v284 = vpop.permute.xlu0 %283
    %285 = vrot.lane.b32.xlu0 %v225, 112
    %v286 = vpop.permute.xlu0 %285
    %287 = vrot.lane.b32.xlu0 %v226, 112
    %v288 = vpop.permute.xlu0 %287
    %289 = vrot.lane.b32.xlu0 %v225, 104
    %v290 = vpop.permute.xlu0 %289
    %291 = vrot.lane.b32.xlu0 %v226, 104
    %v292 = vpop.permute.xlu0 %291
    %293 = vrot.lane.b32.xlu0 %v203, 120
    %v294 = vpop.permute.xlu0 %293
    %295 = vrot.lane.b32.xlu0 %v204, 120
    %v296 = vpop.permute.xlu0 %295
    %297 = vrot.lane.b32.xlu0 %v203, 112
    %v298 = vpop.permute.xlu0 %297
    %299 = vrot.lane.b32.xlu0 %v204, 112
    %v300 = vpop.permute.xlu0 %299
    %301 = vrot.lane.b32.xlu0 %v203, 104
    %v302 = vpop.permute.xlu0 %301
    %303 = vrot.lane.b32.xlu0 %v204, 104
    %v304 = vpop.permute.xlu0 %303
    %305 = vrot.lane.b32.xlu0 %v225, 64
    %v306 = vpop.permute.xlu0 %305
    %vm307 = vcmask 64512
    %v308 = vsel %vm307, %v306, 0
    %v310 = vsel %vm307, %v203, 0
    %312 = vmatprep.subr.mxu0 0.0
    %313 = vmatpush1.xpose.msra.mxu0 %v310
    %314 = vmatprep.subr.mxu0 0.0
    %315 = vmatpush1.xpose.msra.mxu0 0.0
    %316 = vmatprep.subr.mxu0 0.0
    %317 = vmatpush1.xpose.msra.mxu0 0.0
    %318 = vmatprep.subr.mxu0 0.0
    %319 = vmatpush1.xpose.msra.mxu0 0.0
    %320 = vmatprep.subr.mxu0 0.0
    %321 = vmatpush1.xpose.msra.mxu0 0.0
    %322 = vmatprep.subr.mxu0 0.0
    %323 = vmatpush1.xpose.msra.mxu0 0.0
    %324 = vmatprep.subr.mxu0 0.0
    %325 = vmatpush1.xpose.msra.mxu0 0.0
    %326 = vmatprep.subr.mxu0 0.0
    %327 = vmatpush1.xpose.msra.mxu0 0.0
    %328 = vmatprep.subr.mxu0 0.0
    %329 = vmatpush1.xpose.msra.mxu0 0.0
    %330 = vmatprep.subr.mxu0 0.0
    %331 = vmatpush1.xpose.msra.mxu0 0.0
    %332 = vmatprep.subr.mxu0 0.0
    %333 = vmatpush1.xpose.msra.mxu0 0.0
    %334 = vmatprep.subr.mxu0 0.0
    %335 = vmatpush1.xpose.msra.mxu0 0.0
    %336 = vmatprep.subr.mxu0 0.0
    %337 = vmatpush1.xpose.msra.mxu0 0.0
    %338 = vmatprep.subr.mxu0 0.0
    %339 = vmatpush1.xpose.msra.mxu0 0.0
    %340 = vmatprep.subr.mxu0 0.0
    %341 = vmatpush1.xpose.msra.mxu0 0.0
    %342 = vmatprep.subr.mxu0 0.0
    %343 = vmatpush1.xpose.msra.mxu0 0.0
    %344 = vmatprep.subr.mxu0 0.0
    %345 = vmatpush1.xpose.msra.mxu0 0.0
    %346 = vmatprep.subr.mxu0 0.0
    %347 = vmatpush1.xpose.msra.mxu0 0.0
    %348 = vmatprep.subr.mxu0 0.0
    %349 = vmatpush1.xpose.msra.mxu0 0.0
    %350 = vmatprep.subr.mxu0 0.0
    %351 = vmatpush1.xpose.msra.mxu0 0.0
    %352 = vmatprep.subr.mxu0 0.0
    %353 = vmatpush1.xpose.msra.mxu0 0.0
    %354 = vmatprep.subr.mxu0 0.0
    %355 = vmatpush1.xpose.msra.mxu0 0.0
    %356 = vmatprep.subr.mxu0 0.0
    %357 = vmatpush1.xpose.msra.mxu0 0.0
    %358 = vmatprep.subr.mxu0 0.0
    %359 = vmatpush1.xpose.msra.mxu0 0.0
    %360 = vmatprep.subr.mxu0 0.0
    %361 = vmatpush1.xpose.msra.mxu0 0.0
    %362 = vmatprep.subr.mxu0 0.0
    %363 = vmatpush1.xpose.msra.mxu0 0.0
    %364 = vmatprep.subr.mxu0 0.0
    %365 = vmatpush1.xpose.msra.mxu0 0.0
    %366 = vmatprep.subr.mxu0 0.0
    %367 = vmatpush1.xpose.msra.mxu0 0.0
    %368 = vmatprep.subr.mxu0 0.0
    %369 = vmatpush1.xpose.msra.mxu0 0.0
    %370 = vmatprep.subr.mxu0 0.0
    %371 = vmatpush1.xpose.msra.mxu0 0.0
    %372 = vmatprep.subr.mxu0 0.0
    %373 = vmatpush1.xpose.msra.mxu0 0.0
    %374 = vmatprep.subr.mxu0 0.0
    %375 = vmatpush1.xpose.msra.mxu0 0.0
    %376 = vmatprep.mubr.f32.mxu0 0.0
    %377 = vmatmul.mubr.f32.gmra.mrb[0].mxu0 %v308
    %v378 = vpop.f32.mrb[0].mxu0
    %v379 = vadd.f32 0.0, %v378
    %v380 = vpop.f32.mrb[0].mxu0
    %381 = vdwg.mxu0
    %382 = vrot.lane.b32.xlu0 %v226, 64
    %v383 = vpop.permute.xlu0 %382
    %v384 = vsel %vm307, %v383, 0
    %v386 = vsel %vm307, %v204, 0
    %388 = vmatprep.subr.mxu0 0.0
    %389 = vmatpush1.xpose.msra.mxu0 %v386
    %390 = vmatprep.subr.mxu0 0.0
    %391 = vmatpush1.xpose.msra.mxu0 0.0
    %392 = vmatprep.subr.mxu0 0.0
    %393 = vmatpush1.xpose.msra.mxu0 0.0
    %394 = vmatprep.subr.mxu0 0.0
    %395 = vmatpush1.xpose.msra.mxu0 0.0
    %396 = vmatprep.subr.mxu0 0.0
    %397 = vmatpush1.xpose.msra.mxu0 0.0
    %398 = vmatprep.subr.mxu0 0.0
    %399 = vmatpush1.xpose.msra.mxu0 0.0
    %400 = vmatprep.subr.mxu0 0.0
    %401 = vmatpush1.xpose.msra.mxu0 0.0
    %402 = vmatprep.subr.mxu0 0.0
    %403 = vmatpush1.xpose.msra.mxu0 0.0
    %404 = vmatprep.subr.mxu0 0.0
    %405 = vmatpush1.xpose.msra.mxu0 0.0
    %406 = vmatprep.subr.mxu0 0.0
    %407 = vmatpush1.xpose.msra.mxu0 0.0
    %408 = vmatprep.subr.mxu0 0.0
    %409 = vmatpush1.xpose.msra.mxu0 0.0
    %410 = vmatprep.subr.mxu0 0.0
    %411 = vmatpush1.xpose.msra.mxu0 0.0
    %412 = vmatprep.subr.mxu0 0.0
    %413 = vmatpush1.xpose.msra.mxu0 0.0
    %414 = vmatprep.subr.mxu0 0.0
    %415 = vmatpush1.xpose.msra.mxu0 0.0
    %416 = vmatprep.subr.mxu0 0.0
    %417 = vmatpush1.xpose.msra.mxu0 0.0
    %418 = vmatprep.subr.mxu0 0.0
    %419 = vmatpush1.xpose.msra.mxu0 0.0
    %420 = vmatprep.subr.mxu0 0.0
    %421 = vmatpush1.xpose.msra.mxu0 0.0
    %422 = vmatprep.subr.mxu0 0.0
    %423 = vmatpush1.xpose.msra.mxu0 0.0
    %424 = vmatprep.subr.mxu0 0.0
    %425 = vmatpush1.xpose.msra.mxu0 0.0
    %426 = vmatprep.subr.mxu0 0.0
    %427 = vmatpush1.xpose.msra.mxu0 0.0
    %428 = vmatprep.subr.mxu0 0.0
    %429 = vmatpush1.xpose.msra.mxu0 0.0
    %430 = vmatprep.subr.mxu0 0.0
    %431 = vmatpush1.xpose.msra.mxu0 0.0
    %432 = vmatprep.subr.mxu0 0.0
    %433 = vmatpush1.xpose.msra.mxu0 0.0
    %434 = vmatprep.subr.mxu0 0.0
    %435 = vmatpush1.xpose.msra.mxu0 0.0
    %436 = vmatprep.subr.mxu0 0.0
    %437 = vmatpush1.xpose.msra.mxu0 0.0
    %438 = vmatprep.subr.mxu0 0.0
    %439 = vmatpush1.xpose.msra.mxu0 0.0
    %440 = vmatprep.subr.mxu0 0.0
    %441 = vmatpush1.xpose.msra.mxu0 0.0
    %442 = vmatprep.subr.mxu0 0.0
    %443 = vmatpush1.xpose.msra.mxu0 0.0
    %444 = vmatprep.subr.mxu0 0.0
    %445 = vmatpush1.xpose.msra.mxu0 0.0
    %446 = vmatprep.subr.mxu0 0.0
    %447 = vmatpush1.xpose.msra.mxu0 0.0
    %448 = vmatprep.subr.mxu0 0.0
    %449 = vmatpush1.xpose.msra.mxu0 0.0
    %450 = vmatprep.subr.mxu0 0.0
    %451 = vmatpush1.xpose.msra.mxu0 0.0
    %452 = vmatprep.mubr.f32.mxu0 0.0
    %453 = vmatmul.mubr.f32.gmra.mrb[0].mxu0 %v384
    %v454 = vpop.f32.mrb[0].mxu0
    %v455 = vadd.f32 0.0, %v454
    %v456 = vpop.f32.mrb[0].mxu0
    %457 = vdwg.mxu0
    %458 = vrot.lane.b32.xlu0 %v282, 64
    %v459 = vpop.permute.xlu0 %458
    %v460 = vsel %vm307, %v459, 0
    %v462 = vsel %vm307, %v294, 0
    %464 = vmatprep.subr.mxu0 0.0
    %465 = vmatpush1.xpose.msra.mxu0 %v462
    %466 = vmatprep.subr.mxu0 0.0
    %467 = vmatpush1.xpose.msra.mxu0 0.0
    %468 = vmatprep.subr.mxu0 0.0
    %469 = vmatpush1.xpose.msra.mxu0 0.0
    %470 = vmatprep.subr.mxu0 0.0
    %471 = vmatpush1.xpose.msra.mxu0 0.0
    %472 = vmatprep.subr.mxu0 0.0
    %473 = vmatpush1.xpose.msra.mxu0 0.0
    %474 = vmatprep.subr.mxu0 0.0
    %475 = vmatpush1.xpose.msra.mxu0 0.0
    %476 = vmatprep.subr.mxu0 0.0
    %477 = vmatpush1.xpose.msra.mxu0 0.0
    %478 = vmatprep.subr.mxu0 0.0
    %479 = vmatpush1.xpose.msra.mxu0 0.0
    %480 = vmatprep.subr.mxu0 0.0
    %481 = vmatpush1.xpose.msra.mxu0 0.0
    %482 = vmatprep.subr.mxu0 0.0
    %483 = vmatpush1.xpose.msra.mxu0 0.0
    %484 = vmatprep.subr.mxu0 0.0
    %485 = vmatpush1.xpose.msra.mxu0 0.0
    %486 = vmatprep.subr.mxu0 0.0
    %487 = vmatpush1.xpose.msra.mxu0 0.0
    %488 = vmatprep.subr.mxu0 0.0
    %489 = vmatpush1.xpose.msra.mxu0 0.0
    %490 = vmatprep.subr.mxu0 0.0
    %491 = vmatpush1.xpose.msra.mxu0 0.0
    %492 = vmatprep.subr.mxu0 0.0
    %493 = vmatpush1.xpose.msra.mxu0 0.0
    %494 = vmatprep.subr.mxu0 0.0
    %495 = vmatpush1.xpose.msra.mxu0 0.0
    %496 = vmatprep.subr.mxu0 0.0
    %497 = vmatpush1.xpose.msra.mxu0 0.0
    %498 = vmatprep.subr.mxu0 0.0
    %499 = vmatpush1.xpose.msra.mxu0 0.0
    %500 = vmatprep.subr.mxu0 0.0
    %501 = vmatpush1.xpose.msra.mxu0 0.0
    %502 = vmatprep.subr.mxu0 0.0
    %503 = vmatpush1.xpose.msra.mxu0 0.0
    %504 = vmatprep.subr.mxu0 0.0
    %505 = vmatpush1.xpose.msra.mxu0 0.0
    %506 = vmatprep.subr.mxu0 0.0
    %507 = vmatpush1.xpose.msra.mxu0 0.0
    %508 = vmatprep.subr.mxu0 0.0
    %509 = vmatpush1.xpose.msra.mxu0 0.0
    %510 = vmatprep.subr.mxu0 0.0
    %511 = vmatpush1.xpose.msra.mxu0 0.0
    %512 = vmatprep.subr.mxu0 0.0
    %513 = vmatpush1.xpose.msra.mxu0 0.0
    %514 = vmatprep.subr.mxu0 0.0
    %515 = vmatpush1.xpose.msra.mxu0 0.0
    %516 = vmatprep.subr.mxu0 0.0
    %517 = vmatpush1.xpose.msra.mxu0 0.0
    %518 = vmatprep.subr.mxu0 0.0
    %519 = vmatpush1.xpose.msra.mxu0 0.0
    %520 = vmatprep.subr.mxu0 0.0
    %521 = vmatpush1.xpose.msra.mxu0 0.0
    %522 = vmatprep.subr.mxu0 0.0
    %523 = vmatpush1.xpose.msra.mxu0 0.0
    %524 = vmatprep.subr.mxu0 0.0
    %525 = vmatpush1.xpose.msra.mxu0 0.0
    %526 = vmatprep.subr.mxu0 0.0
    %527 = vmatpush1.xpose.msra.mxu0 0.0
    %528 = vmatprep.mubr.f32.mxu0 0.0
    %529 = vmatmul.mubr.f32.gmra.mrb[0].mxu0 %v460
    %v530 = vpop.f32.mrb[0].mxu0
    %v531 = vadd.f32 0.0, %v530
    %v532 = vpop.f32.mrb[0].mxu0
    %533 = vdwg.mxu0
    %534 = vrot.lane.b32.xlu0 %v284, 64
    %v535 = vpop.permute.xlu0 %534
    %v536 = vsel %vm307, %v535, 0
    %v538 = vsel %vm307, %v296, 0
    %540 = vmatprep.subr.mxu0 0.0
    %541 = vmatpush1.xpose.msra.mxu0 %v538
    %542 = vmatprep.subr.mxu0 0.0
    %543 = vmatpush1.xpose.msra.mxu0 0.0
    %544 = vmatprep.subr.mxu0 0.0
    %545 = vmatpush1.xpose.msra.mxu0 0.0
    %546 = vmatprep.subr.mxu0 0.0
    %547 = vmatpush1.xpose.msra.mxu0 0.0
    %548 = vmatprep.subr.mxu0 0.0
    %549 = vmatpush1.xpose.msra.mxu0 0.0
    %550 = vmatprep.subr.mxu0 0.0
    %551 = vmatpush1.xpose.msra.mxu0 0.0
    %552 = vmatprep.subr.mxu0 0.0
    %553 = vmatpush1.xpose.msra.mxu0 0.0
    %554 = vmatprep.subr.mxu0 0.0
    %555 = vmatpush1.xpose.msra.mxu0 0.0
    %556 = vmatprep.subr.mxu0 0.0
    %557 = vmatpush1.xpose.msra.mxu0 0.0
    %558 = vmatprep.subr.mxu0 0.0
    %559 = vmatpush1.xpose.msra.mxu0 0.0
    %560 = vmatprep.subr.mxu0 0.0
    %561 = vmatpush1.xpose.msra.mxu0 0.0
    %562 = vmatprep.subr.mxu0 0.0
    %563 = vmatpush1.xpose.msra.mxu0 0.0
    %564 = vmatprep.subr.mxu0 0.0
    %565 = vmatpush1.xpose.msra.mxu0 0.0
    %566 = vmatprep.subr.mxu0 0.0
    %567 = vmatpush1.xpose.msra.mxu0 0.0
    %568 = vmatprep.subr.mxu0 0.0
    %569 = vmatpush1.xpose.msra.mxu0 0.0
    %570 = vmatprep.subr.mxu0 0.0
    %571 = vmatpush1.xpose.msra.mxu0 0.0
    %572 = vmatprep.subr.mxu0 0.0
    %573 = vmatpush1.xpose.msra.mxu0 0.0
    %574 = vmatprep.subr.mxu0 0.0
    %575 = vmatpush1.xpose.msra.mxu0 0.0
    %576 = vmatprep.subr.mxu0 0.0
    %577 = vmatpush1.xpose.msra.mxu0 0.0
    %578 = vmatprep.subr.mxu0 0.0
    %579 = vmatpush1.xpose.msra.mxu0 0.0
    %580 = vmatprep.subr.mxu0 0.0
    %581 = vmatpush1.xpose.msra.mxu0 0.0
    %582 = vmatprep.subr.mxu0 0.0
    %583 = vmatpush1.xpose.msra.mxu0 0.0
    %584 = vmatprep.subr.mxu0 0.0
    %585 = vmatpush1.xpose.msra.mxu0 0.0
    %586 = vmatprep.subr.mxu0 0.0
    %587 = vmatpush1.xpose.msra.mxu0 0.0
    %588 = vmatprep.subr.mxu0 0.0
    %589 = vmatpush1.xpose.msra.mxu0 0.0
    %590 = vmatprep.subr.mxu0 0.0
    %591 = vmatpush1.xpose.msra.mxu0 0.0
    %592 = vmatprep.subr.mxu0 0.0
    %593 = vmatpush1.xpose.msra.mxu0 0.0
    %594 = vmatprep.subr.mxu0 0.0
    %595 = vmatpush1.xpose.msra.mxu0 0.0
    %596 = vmatprep.subr.mxu0 0.0
    %597 = vmatpush1.xpose.msra.mxu0 0.0
    %598 = vmatprep.subr.mxu0 0.0
    %599 = vmatpush1.xpose.msra.mxu0 0.0
    %600 = vmatprep.subr.mxu0 0.0
    %601 = vmatpush1.xpose.msra.mxu0 0.0
    %602 = vmatprep.subr.mxu0 0.0
    %603 = vmatpush1.xpose.msra.mxu0 0.0
    %604 = vmatprep.mubr.f32.mxu0 0.0
    %605 = vmatmul.mubr.f32.gmra.mrb[0].mxu0 %v536
    %v606 = vpop.f32.mrb[0].mxu0
    %v607 = vadd.f32 0.0, %v606
    %v608 = vpop.f32.mrb[0].mxu0
    %609 = vdwg.mxu0
    %610 = vrot.lane.b32.xlu0 %v286, 64
    %v611 = vpop.permute.xlu0 %610
    %v612 = vsel %vm307, %v611, 0
    %v614 = vsel %vm307, %v298, 0
    %616 = vmatprep.subr.mxu0 0.0
    %617 = vmatpush1.xpose.msra.mxu0 %v614
    %618 = vmatprep.subr.mxu0 0.0
    %619 = vmatpush1.xpose.msra.mxu0 0.0
    %620 = vmatprep.subr.mxu0 0.0
    %621 = vmatpush1.xpose.msra.mxu0 0.0
    %622 = vmatprep.subr.mxu0 0.0
    %623 = vmatpush1.xpose.msra.mxu0 0.0
    %624 = vmatprep.subr.mxu0 0.0
    %625 = vmatpush1.xpose.msra.mxu0 0.0
    %626 = vmatprep.subr.mxu0 0.0
    %627 = vmatpush1.xpose.msra.mxu0 0.0
    %628 = vmatprep.subr.mxu0 0.0
    %629 = vmatpush1.xpose.msra.mxu0 0.0
    %630 = vmatprep.subr.mxu0 0.0
    %631 = vmatpush1.xpose.msra.mxu0 0.0
    %632 = vmatprep.subr.mxu0 0.0
    %633 = vmatpush1.xpose.msra.mxu0 0.0
    %634 = vmatprep.subr.mxu0 0.0
    %635 = vmatpush1.xpose.msra.mxu0 0.0
    %636 = vmatprep.subr.mxu0 0.0
    %637 = vmatpush1.xpose.msra.mxu0 0.0
    %638 = vmatprep.subr.mxu0 0.0
    %639 = vmatpush1.xpose.msra.mxu0 0.0
    %640 = vmatprep.subr.mxu0 0.0
    %641 = vmatpush1.xpose.msra.mxu0 0.0
    %642 = vmatprep.subr.mxu0 0.0
    %643 = vmatpush1.xpose.msra.mxu0 0.0
    %644 = vmatprep.subr.mxu0 0.0
    %645 = vmatpush1.xpose.msra.mxu0 0.0
    %646 = vmatprep.subr.mxu0 0.0
    %647 = vmatpush1.xpose.msra.mxu0 0.0
    %648 = vmatprep.subr.mxu0 0.0
    %649 = vmatpush1.xpose.msra.mxu0 0.0
    %650 = vmatprep.subr.mxu0 0.0
    %651 = vmatpush1.xpose.msra.mxu0 0.0
    %652 = vmatprep.subr.mxu0 0.0
    %653 = vmatpush1.xpose.msra.mxu0 0.0
    %654 = vmatprep.subr.mxu0 0.0
    %655 = vmatpush1.xpose.msra.mxu0 0.0
    %656 = vmatprep.subr.mxu0 0.0
    %657 = vmatpush1.xpose.msra.mxu0 0.0
    %658 = vmatprep.subr.mxu0 0.0
    %659 = vmatpush1.xpose.msra.mxu0 0.0
    %660 = vmatprep.subr.mxu0 0.0
    %661 = vmatpush1.xpose.msra.mxu0 0.0
    %662 = vmatprep.subr.mxu0 0.0
    %663 = vmatpush1.xpose.msra.mxu0 0.0
    %664 = vmatprep.subr.mxu0 0.0
    %665 = vmatpush1.xpose.msra.mxu0 0.0
    %666 = vmatprep.subr.mxu0 0.0
    %667 = vmatpush1.xpose.msra.mxu0 0.0
    %668 = vmatprep.subr.mxu0 0.0
    %669 = vmatpush1.xpose.msra.mxu0 0.0
    %670 = vmatprep.subr.mxu0 0.0
    %671 = vmatpush1.xpose.msra.mxu0 0.0
    %672 = vmatprep.subr.mxu0 0.0
    %673 = vmatpush1.xpose.msra.mxu0 0.0
    %674 = vmatprep.subr.mxu0 0.0
    %675 = vmatpush1.xpose.msra.mxu0 0.0
    %676 = vmatprep.subr.mxu0 0.0
    %677 = vmatpush1.xpose.msra.mxu0 0.0
    %678 = vmatprep.subr.mxu0 0.0
    %679 = vmatpush1.xpose.msra.mxu0 0.0
    %680 = vmatprep.mubr.f32.mxu0 0.0
    %681 = vmatmul.mubr.f32.gmra.mrb[0].mxu0 %v612
    %v682 = vpop.f32.mrb[0].mxu0
    %v683 = vadd.f32 0.0, %v682
    %v684 = vpop.f32.mrb[0].mxu0
    %685 = vdwg.mxu0
    %686 = vrot.lane.b32.xlu0 %v288, 64
    %v687 = vpop.permute.xlu0 %686
    %v688 = vsel %vm307, %v687, 0
    %v690 = vsel %vm307, %v300, 0
    %692 = vmatprep.subr.mxu0 0.0
    %693 = vmatpush1.xpose.msra.mxu0 %v690
    %694 = vmatprep.subr.mxu0 0.0
    %695 = vmatpush1.xpose.msra.mxu0 0.0
    %696 = vmatprep.subr.mxu0 0.0
    %697 = vmatpush1.xpose.msra.mxu0 0.0
    %698 = vmatprep.subr.mxu0 0.0
    %699 = vmatpush1.xpose.msra.mxu0 0.0
    %700 = vmatprep.subr.mxu0 0.0
    %701 = vmatpush1.xpose.msra.mxu0 0.0
    %702 = vmatprep.subr.mxu0 0.0
    %703 = vmatpush1.xpose.msra.mxu0 0.0
    %704 = vmatprep.subr.mxu0 0.0
    %705 = vmatpush1.xpose.msra.mxu0 0.0
    %706 = vmatprep.subr.mxu0 0.0
    %707 = vmatpush1.xpose.msra.mxu0 0.0
    %708 = vmatprep.subr.mxu0 0.0
    %709 = vmatpush1.xpose.msra.mxu0 0.0
    %710 = vmatprep.subr.mxu0 0.0
    %711 = vmatpush1.xpose.msra.mxu0 0.0
    %712 = vmatprep.subr.mxu0 0.0
    %713 = vmatpush1.xpose.msra.mxu0 0.0
    %714 = vmatprep.subr.mxu0 0.0
    %715 = vmatpush1.xpose.msra.mxu0 0.0
    %716 = vmatprep.subr.mxu0 0.0
    %717 = vmatpush1.xpose.msra.mxu0 0.0
    %718 = vmatprep.subr.mxu0 0.0
    %719 = vmatpush1.xpose.msra.mxu0 0.0
    %720 = vmatprep.subr.mxu0 0.0
    %721 = vmatpush1.xpose.msra.mxu0 0.0
    %722 = vmatprep.subr.mxu0 0.0
    %723 = vmatpush1.xpose.msra.mxu0 0.0
    %724 = vmatprep.subr.mxu0 0.0
    %725 = vmatpush1.xpose.msra.mxu0 0.0
    %726 = vmatprep.subr.mxu0 0.0
    %727 = vmatpush1.xpose.msra.mxu0 0.0
    %728 = vmatprep.subr.mxu0 0.0
    %729 = vmatpush1.xpose.msra.mxu0 0.0
    %730 = vmatprep.subr.mxu0 0.0
    %731 = vmatpush1.xpose.msra.mxu0 0.0
    %732 = vmatprep.subr.mxu0 0.0
    %733 = vmatpush1.xpose.msra.mxu0 0.0
    %734 = vmatprep.subr.mxu0 0.0
    %735 = vmatpush1.xpose.msra.mxu0 0.0
    %736 = vmatprep.subr.mxu0 0.0
    %737 = vmatpush1.xpose.msra.mxu0 0.0
    %738 = vmatprep.subr.mxu0 0.0
    %739 = vmatpush1.xpose.msra.mxu0 0.0
    %740 = vmatprep.subr.mxu0 0.0
    %741 = vmatpush1.xpose.msra.mxu0 0.0
    %742 = vmatprep.subr.mxu0 0.0
    %743 = vmatpush1.xpose.msra.mxu0 0.0
    %744 = vmatprep.subr.mxu0 0.0
    %745 = vmatpush1.xpose.msra.mxu0 0.0
    %746 = vmatprep.subr.mxu0 0.0
    %747 = vmatpush1.xpose.msra.mxu0 0.0
    %748 = vmatprep.subr.mxu0 0.0
    %749 = vmatpush1.xpose.msra.mxu0 0.0
    %750 = vmatprep.subr.mxu0 0.0
    %751 = vmatpush1.xpose.msra.mxu0 0.0
    %752 = vmatprep.subr.mxu0 0.0
    %753 = vmatpush1.xpose.msra.mxu0 0.0
    %754 = vmatprep.subr.mxu0 0.0
    %755 = vmatpush1.xpose.msra.mxu0 0.0
    %756 = vmatprep.mubr.f32.mxu0 0.0
    %757 = vmatmul.mubr.f32.gmra.mrb[0].mxu0 %v688
    %v758 = vpop.f32.mrb[0].mxu0
    %v759 = vadd.f32 0.0, %v758
    %v760 = vpop.f32.mrb[0].mxu0
    %761 = vdwg.mxu0
    %762 = vrot.lane.b32.xlu0 %v290, 64
    %v763 = vpop.permute.xlu0 %762
    %v764 = vsel %vm307, %v763, 0
    %v766 = vsel %vm307, %v302, 0
    %768 = vmatprep.subr.mxu0 0.0
    %769 = vmatpush1.xpose.msra.mxu0 %v766
    %770 = vmatprep.subr.mxu0 0.0
    %771 = vmatpush1.xpose.msra.mxu0 0.0
    %772 = vmatprep.subr.mxu0 0.0
    %773 = vmatpush1.xpose.msra.mxu0 0.0
    %774 = vmatprep.subr.mxu0 0.0
    %775 = vmatpush1.xpose.msra.mxu0 0.0
    %776 = vmatprep.subr.mxu0 0.0
    %777 = vmatpush1.xpose.msra.mxu0 0.0
    %778 = vmatprep.subr.mxu0 0.0
    %779 = vmatpush1.xpose.msra.mxu0 0.0
    %780 = vmatprep.subr.mxu0 0.0
    %781 = vmatpush1.xpose.msra.mxu0 0.0
    %782 = vmatprep.subr.mxu0 0.0
    %783 = vmatpush1.xpose.msra.mxu0 0.0
    %784 = vmatprep.subr.mxu0 0.0
    %785 = vmatpush1.xpose.msra.mxu0 0.0
    %786 = vmatprep.subr.mxu0 0.0
    %787 = vmatpush1.xpose.msra.mxu0 0.0
    %788 = vmatprep.subr.mxu0 0.0
    %789 = vmatpush1.xpose.msra.mxu0 0.0
    %790 = vmatprep.subr.mxu0 0.0
    %791 = vmatpush1.xpose.msra.mxu0 0.0
    %792 = vmatprep.subr.mxu0 0.0
    %793 = vmatpush1.xpose.msra.mxu0 0.0
    %794 = vmatprep.subr.mxu0 0.0
    %795 = vmatpush1.xpose.msra.mxu0 0.0
    %796 = vmatprep.subr.mxu0 0.0
    %797 = vmatpush1.xpose.msra.mxu0 0.0
    %798 = vmatprep.subr.mxu0 0.0
    %799 = vmatpush1.xpose.msra.mxu0 0.0
    %800 = vmatprep.subr.mxu0 0.0
    %801 = vmatpush1.xpose.msra.mxu0 0.0
    %802 = vmatprep.subr.mxu0 0.0
    %803 = vmatpush1.xpose.msra.mxu0 0.0
    %804 = vmatprep.subr.mxu0 0.0
    %805 = vmatpush1.xpose.msra.mxu0 0.0
    %806 = vmatprep.subr.mxu0 0.0
    %807 = vmatpush1.xpose.msra.mxu0 0.0
    %808 = vmatprep.subr.mxu0 0.0
    %809 = vmatpush1.xpose.msra.mxu0 0.0
    %810 = vmatprep.subr.mxu0 0.0
    %811 = vmatpush1.xpose.msra.mxu0 0.0
    %812 = vmatprep.subr.mxu0 0.0
    %813 = vmatpush1.xpose.msra.mxu0 0.0
    %814 = vmatprep.subr.mxu0 0.0
    %815 = vmatpush1.xpose.msra.mxu0 0.0
    %816 = vmatprep.subr.mxu0 0.0
    %817 = vmatpush1.xpose.msra.mxu0 0.0
    %818 = vmatprep.subr.mxu0 0.0
    %819 = vmatpush1.xpose.msra.mxu0 0.0
    %820 = vmatprep.subr.mxu0 0.0
    %821 = vmatpush1.xpose.msra.mxu0 0.0
    %822 = vmatprep.subr.mxu0 0.0
    %823 = vmatpush1.xpose.msra.mxu0 0.0
    %824 = vmatprep.subr.mxu0 0.0
    %825 = vmatpush1.xpose.msra.mxu0 0.0
    %826 = vmatprep.subr.mxu0 0.0
    %827 = vmatpush1.xpose.msra.mxu0 0.0
    %828 = vmatprep.subr.mxu0 0.0
    %829 = vmatpush1.xpose.msra.mxu0 0.0
    %830 = vmatprep.subr.mxu0 0.0
    %831 = vmatpush1.xpose.msra.mxu0 0.0
    %832 = vmatprep.mubr.f32.mxu0 0.0
    %833 = vmatmul.mubr.f32.gmra.mrb[0].mxu0 %v764
    %v834 = vpop.f32.mrb[0].mxu0
    %v835 = vadd.f32 0.0, %v834
    %v836 = vpop.f32.mrb[0].mxu0
    %837 = vdwg.mxu0
    %838 = vrot.lane.b32.xlu0 %v292, 64
    %v839 = vpop.permute.xlu0 %838
    %v840 = vsel %vm307, %v839, 0
    %v842 = vsel %vm307, %v304, 0
    %844 = vmatprep.subr.mxu0 0.0
    %845 = vmatpush1.xpose.msra.mxu0 %v842
    %846 = vmatprep.subr.mxu0 0.0
    %847 = vmatpush1.xpose.msra.mxu0 0.0
    %848 = vmatprep.subr.mxu0 0.0
    %849 = vmatpush1.xpose.msra.mxu0 0.0
    %850 = vmatprep.subr.mxu0 0.0
    %851 = vmatpush1.xpose.msra.mxu0 0.0
    %852 = vmatprep.subr.mxu0 0.0
    %853 = vmatpush1.xpose.msra.mxu0 0.0
    %854 = vmatprep.subr.mxu0 0.0
    %855 = vmatpush1.xpose.msra.mxu0 0.0
    %856 = vmatprep.subr.mxu0 0.0
    %857 = vmatpush1.xpose.msra.mxu0 0.0
    %858 = vmatprep.subr.mxu0 0.0
    %859 = vmatpush1.xpose.msra.mxu0 0.0
    %860 = vmatprep.subr.mxu0 0.0
    %861 = vmatpush1.xpose.msra.mxu0 0.0
    %862 = vmatprep.subr.mxu0 0.0
    %863 = vmatpush1.xpose.msra.mxu0 0.0
    %864 = vmatprep.subr.mxu0 0.0
    %865 = vmatpush1.xpose.msra.mxu0 0.0
    %866 = vmatprep.subr.mxu0 0.0
    %867 = vmatpush1.xpose.msra.mxu0 0.0
    %868 = vmatprep.subr.mxu0 0.0
    %869 = vmatpush1.xpose.msra.mxu0 0.0
    %870 = vmatprep.subr.mxu0 0.0
    %871 = vmatpush1.xpose.msra.mxu0 0.0
    %872 = vmatprep.subr.mxu0 0.0
    %873 = vmatpush1.xpose.msra.mxu0 0.0
    %874 = vmatprep.subr.mxu0 0.0
    %875 = vmatpush1.xpose.msra.mxu0 0.0
    %876 = vmatprep.subr.mxu0 0.0
    %877 = vmatpush1.xpose.msra.mxu0 0.0
    %878 = vmatprep.subr.mxu0 0.0
    %879 = vmatpush1.xpose.msra.mxu0 0.0
    %880 = vmatprep.subr.mxu0 0.0
    %881 = vmatpush1.xpose.msra.mxu0 0.0
    %882 = vmatprep.subr.mxu0 0.0
    %883 = vmatpush1.xpose.msra.mxu0 0.0
    %884 = vmatprep.subr.mxu0 0.0
    %885 = vmatpush1.xpose.msra.mxu0 0.0
    %886 = vmatprep.subr.mxu0 0.0
    %887 = vmatpush1.xpose.msra.mxu0 0.0
    %888 = vmatprep.subr.mxu0 0.0
    %889 = vmatpush1.xpose.msra.mxu0 0.0
    %890 = vmatprep.subr.mxu0 0.0
    %891 = vmatpush1.xpose.msra.mxu0 0.0
    %892 = vmatprep.subr.mxu0 0.0
    %893 = vmatpush1.xpose.msra.mxu0 0.0
    %894 = vmatprep.subr.mxu0 0.0
    %895 = vmatpush1.xpose.msra.mxu0 0.0
    %896 = vmatprep.subr.mxu0 0.0
    %897 = vmatpush1.xpose.msra.mxu0 0.0
    %898 = vmatprep.subr.mxu0 0.0
    %899 = vmatpush1.xpose.msra.mxu0 0.0
    %900 = vmatprep.subr.mxu0 0.0
    %901 = vmatpush1.xpose.msra.mxu0 0.0
    %902 = vmatprep.subr.mxu0 0.0
    %903 = vmatpush1.xpose.msra.mxu0 0.0
    %904 = vmatprep.subr.mxu0 0.0
    %905 = vmatpush1.xpose.msra.mxu0 0.0
    %906 = vmatprep.subr.mxu0 0.0
    %907 = vmatpush1.xpose.msra.mxu0 0.0
    %908 = vmatprep.mubr.f32.mxu0 0.0
    %909 = vmatmul.mubr.f32.gmra.mrb[0].mxu0 %v840
    %v910 = vpop.f32.mrb[0].mxu0
    %v911 = vadd.f32 0.0, %v910
    %v912 = vpop.f32.mrb[0].mxu0
    %913 = vdwg.mxu0
    %v914 = vsel %vm277, %v379, -1e+10
    %v915 = vsel %vm278, %v455, -1e+10
    %v916 = vsel %vm277, %v531, -1e+10
    %v917 = vsel %vm278, %v607, -1e+10
    %v918 = vsel %vm277, %v683, -1e+10
    %v919 = vsel %vm278, %v759, -1e+10
    %v920 = vsel %vm277, %v835, -1e+10
    %v921 = vsel %vm278, %v911, -1e+10
    %v922 = vsel %vm307, %v914, -inf
    %923 = vmax.xlane.f32.xlu0 %v922
    %v924 = vpop.xlane.xlu0 %923
    %v925 = vsel %vm307, %v915, -inf
    %926 = vmax.xlane.f32.xlu0 %v925
    %v927 = vpop.xlane.xlu0 %926
    %v928 = vsel %vm307, %v916, -inf
    %929 = vmax.xlane.f32.xlu0 %v928
    %v930 = vpop.xlane.xlu0 %929
    %v931 = vsel %vm307, %v917, -inf
    %932 = vmax.xlane.f32.xlu0 %v931
    %v933 = vpop.xlane.xlu0 %932
    %v934 = vsel %vm307, %v918, -inf
    %935 = vmax.xlane.f32.xlu0 %v934
    %v936 = vpop.xlane.xlu0 %935
    %v937 = vsel %vm307, %v919, -inf
    %938 = vmax.xlane.f32.xlu0 %v937
    %v939 = vpop.xlane.xlu0 %938
    %v940 = vsel %vm307, %v920, -inf
    %941 = vmax.xlane.f32.xlu0 %v940
    %v942 = vpop.xlane.xlu0 %941
    %v943 = vsel %vm307, %v921, -inf
    %944 = vmax.xlane.f32.xlu0 %v943
    %v945 = vpop.xlane.xlu0 %944
    %v946 = vsub.f32 %v914, %v924
    %v947 = vsub.f32 %v915, %v927
    %v948 = vsub.f32 %v916, %v930
    %v949 = vsub.f32 %v917, %v933
    %v950 = vsub.f32 %v918, %v936
    %v951 = vsub.f32 %v919, %v939
    %v952 = vsub.f32 %v920, %v942
    %v953 = vsub.f32 %v921, %v945
    %v954 = vmul.f32 %v946, 1.442695
    %v955 = vpow.pop %v954
    %v956 = vmul.f32 %v947, 1.442695
    %v957 = vpow.pop %v956
    %v958 = vmul.f32 %v948, 1.442695
    %v959 = vpow.pop %v958
    %v960 = vmul.f32 %v949, 1.442695
    %v961 = vpow.pop %v960
    %v962 = vmul.f32 %v950, 1.442695
    %v963 = vpow.pop %v962
    %v964 = vmul.f32 %v951, 1.442695
    %v965 = vpow.pop %v964
    %v966 = vmul.f32 %v952, 1.442695
    %v967 = vpow.pop %v966
    %v968 = vmul.f32 %v953, 1.442695
    %v969 = vpow.pop %v968
    %v970 = vsel %vm307, %v955, 0.0
    %971 = vadd.xlane.f32.xlu0 %v970
    %v972 = vpop.xlane.xlu0 %971
    %v973 = vsel %vm307, %v957, 0.0
    %974 = vadd.xlane.f32.xlu0 %v973
    %v975 = vpop.xlane.xlu0 %974
    %v976 = vsel %vm307, %v959, 0.0
    %977 = vadd.xlane.f32.xlu0 %v976
    %v978 = vpop.xlane.xlu0 %977
    %v979 = vsel %vm307, %v961, 0.0
    %980 = vadd.xlane.f32.xlu0 %v979
    %v981 = vpop.xlane.xlu0 %980
    %v982 = vsel %vm307, %v963, 0.0
    %983 = vadd.xlane.f32.xlu0 %v982
    %v984 = vpop.xlane.xlu0 %983
    %v985 = vsel %vm307, %v965, 0.0
    %986 = vadd.xlane.f32.xlu0 %v985
    %v987 = vpop.xlane.xlu0 %986
    %v988 = vsel %vm307, %v967, 0.0
    %989 = vadd.xlane.f32.xlu0 %v988
    %v990 = vpop.xlane.xlu0 %989
    %v991 = vsel %vm307, %v969, 0.0
    %992 = vadd.xlane.f32.xlu0 %v991
    %v993 = vpop.xlane.xlu0 %992
    %v994 = vrcp.pop %v972
    %v995 = vmul.f32 %v955, %v994
    %v996 = vrcp.pop %v975
    %v997 = vmul.f32 %v957, %v996
    %v998 = vrcp.pop %v978
    %v999 = vmul.f32 %v959, %v998
    %v1000 = vrcp.pop %v981
    %v1001 = vmul.f32 %v961, %v1000
    %v1002 = vrcp.pop %v984
    %v1003 = vmul.f32 %v963, %v1002
    %v1004 = vrcp.pop %v987
    %v1005 = vmul.f32 %v965, %v1004
    %v1006 = vrcp.pop %v990
    %v1007 = vmul.f32 %v967, %v1006
    %v1008 = vrcp.pop %v993
    %v1009 = vmul.f32 %v969, %v1008
    %v1011 = vsel %vm307, %v995, 0
    %1013 = vmatprep.subr.mxu0 0.0
    %1014 = vmatpush1.msra.mxu0 %v242
    %1015 = vmatprep.subr.mxu0 0.0
    %1016 = vmatpush1.msra.mxu0 0.0
    %1017 = vmatprep.subr.mxu0 0.0
    %1018 = vmatpush1.msra.mxu0 0.0
    %1019 = vmatprep.subr.mxu0 0.0
    %1020 = vmatpush1.msra.mxu0 0.0
    %1021 = vmatprep.subr.mxu0 0.0
    %1022 = vmatpush1.msra.mxu0 0.0
    %1023 = vmatprep.subr.mxu0 0.0
    %1024 = vmatpush1.msra.mxu0 0.0
    %1025 = vmatprep.subr.mxu0 0.0
    %1026 = vmatpush1.msra.mxu0 0.0
    %1027 = vmatprep.subr.mxu0 0.0
    %1028 = vmatpush1.msra.mxu0 0.0
    %1029 = vmatprep.subr.mxu0 0.0
    %1030 = vmatpush1.msra.mxu0 0.0
    %1031 = vmatprep.subr.mxu0 0.0
    %1032 = vmatpush1.msra.mxu0 0.0
    %1033 = vmatprep.subr.mxu0 0.0
    %1034 = vmatpush1.msra.mxu0 0.0
    %1035 = vmatprep.subr.mxu0 0.0
    %1036 = vmatpush1.msra.mxu0 0.0
    %1037 = vmatprep.subr.mxu0 0.0
    %1038 = vmatpush1.msra.mxu0 0.0
    %1039 = vmatprep.subr.mxu0 0.0
    %1040 = vmatpush1.msra.mxu0 0.0
    %1041 = vmatprep.subr.mxu0 0.0
    %1042 = vmatpush1.msra.mxu0 0.0
    %1043 = vmatprep.subr.mxu0 0.0
    %1044 = vmatpush1.msra.mxu0 0.0
    %1045 = vmatprep.subr.mxu0 0.0
    %1046 = vmatpush1.msra.mxu0 0.0
    %1047 = vmatprep.subr.mxu0 0.0
    %1048 = vmatpush1.msra.mxu0 0.0
    %1049 = vmatprep.subr.mxu0 0.0
    %1050 = vmatpush1.msra.mxu0 0.0
    %1051 = vmatprep.subr.mxu0 0.0
    %1052 = vmatpush1.msra.mxu0 0.0
    %1053 = vmatprep.subr.mxu0 0.0
    %1054 = vmatpush1.msra.mxu0 0.0
    %1055 = vmatprep.subr.mxu0 0.0
    %1056 = vmatpush1.msra.mxu0 0.0
    %1057 = vmatprep.subr.mxu0 0.0
    %1058 = vmatpush1.msra.mxu0 0.0
    %1059 = vmatprep.subr.mxu0 0.0
    %1060 = vmatpush1.msra.mxu0 0.0
    %1061 = vmatprep.subr.mxu0 0.0
    %1062 = vmatpush1.msra.mxu0 0.0
    %1063 = vmatprep.subr.mxu0 0.0
    %1064 = vmatpush1.msra.mxu0 0.0
    %1065 = vmatprep.subr.mxu0 0.0
    %1066 = vmatpush1.msra.mxu0 0.0
    %1067 = vmatprep.subr.mxu0 0.0
    %1068 = vmatpush1.msra.mxu0 0.0
    %1069 = vmatprep.subr.mxu0 0.0
    %1070 = vmatpush1.msra.mxu0 0.0
    %1071 = vmatprep.subr.mxu0 0.0
    %1072 = vmatpush1.msra.mxu0 0.0
    %1073 = vmatprep.subr.mxu0 0.0
    %1074 = vmatpush1.msra.mxu0 0.0
    %1075 = vmatprep.subr.mxu0 0.0
    %1076 = vmatpush1.msra.mxu0 0.0
    %1077 = vmatprep.mubr.f32.mxu0 0.0
    %1078 = vmatmul.mubr.f32.gmra.mrb[0].mxu0 %v1011
    %v1079 = vpop.f32.mrb[0].mxu0
    %v1080 = vadd.f32 0.0, %v1079
    %v1081 = vpop.f32.mrb[0].mxu0
    %1082 = vdwg.mxu0
    %v1084 = vsel %vm307, %v997, 0
    %1086 = vmatprep.subr.mxu0 0.0
    %1087 = vmatpush1.msra.mxu0 %v244
    %1088 = vmatprep.subr.mxu0 0.0
    %1089 = vmatpush1.msra.mxu0 0.0
    %1090 = vmatprep.subr.mxu0 0.0
    %1091 = vmatpush1.msra.mxu0 0.0
    %1092 = vmatprep.subr.mxu0 0.0
    %1093 = vmatpush1.msra.mxu0 0.0
    %1094 = vmatprep.subr.mxu0 0.0
    %1095 = vmatpush1.msra.mxu0 0.0
    %1096 = vmatprep.subr.mxu0 0.0
    %1097 = vmatpush1.msra.mxu0 0.0
    %1098 = vmatprep.subr.mxu0 0.0
    %1099 = vmatpush1.msra.mxu0 0.0
    %1100 = vmatprep.subr.mxu0 0.0
    %1101 = vmatpush1.msra.mxu0 0.0
    %1102 = vmatprep.subr.mxu0 0.0
    %1103 = vmatpush1.msra.mxu0 0.0
    %1104 = vmatprep.subr.mxu0 0.0
    %1105 = vmatpush1.msra.mxu0 0.0
    %1106 = vmatprep.subr.mxu0 0.0
    %1107 = vmatpush1.msra.mxu0 0.0
    %1108 = vmatprep.subr.mxu0 0.0
    %1109 = vmatpush1.msra.mxu0 0.0
    %1110 = vmatprep.subr.mxu0 0.0
    %1111 = vmatpush1.msra.mxu0 0.0
    %1112 = vmatprep.subr.mxu0 0.0
    %1113 = vmatpush1.msra.mxu0 0.0
    %1114 = vmatprep.subr.mxu0 0.0
    %1115 = vmatpush1.msra.mxu0 0.0
    %1116 = vmatprep.subr.mxu0 0.0
    %1117 = vmatpush1.msra.mxu0 0.0
    %1118 = vmatprep.subr.mxu0 0.0
    %1119 = vmatpush1.msra.mxu0 0.0
    %1120 = vmatprep.subr.mxu0 0.0
    %1121 = vmatpush1.msra.mxu0 0.0
    %1122 = vmatprep.subr.mxu0 0.0
    %1123 = vmatpush1.msra.mxu0 0.0
    %1124 = vmatprep.subr.mxu0 0.0
    %1125 = vmatpush1.msra.mxu0 0.0
    %1126 = vmatprep.subr.mxu0 0.0
    %1127 = vmatpush1.msra.mxu0 0.0
    %1128 = vmatprep.subr.mxu0 0.0
    %1129 = vmatpush1.msra.mxu0 0.0
    %1130 = vmatprep.subr.mxu0 0.0
    %1131 = vmatpush1.msra.mxu0 0.0
    %1132 = vmatprep.subr.mxu0 0.0
    %1133 = vmatpush1.msra.mxu0 0.0
    %1134 = vmatprep.subr.mxu0 0.0
    %1135 = vmatpush1.msra.mxu0 0.0
    %1136 = vmatprep.subr.mxu0 0.0
    %1137 = vmatpush1.msra.mxu0 0.0
    %1138 = vmatprep.subr.mxu0 0.0
    %1139 = vmatpush1.msra.mxu0 0.0
    %1140 = vmatprep.subr.mxu0 0.0
    %1141 = vmatpush1.msra.mxu0 0.0
    %1142 = vmatprep.subr.mxu0 0.0
    %1143 = vmatpush1.msra.mxu0 0.0
    %1144 = vmatprep.subr.mxu0 0.0
    %1145 = vmatpush1.msra.mxu0 0.0
    %1146 = vmatprep.subr.mxu0 0.0
    %1147 = vmatpush1.msra.mxu0 0.0
    %1148 = vmatprep.subr.mxu0 0.0
    %1149 = vmatpush1.msra.mxu0 0.0
    %1150 = vmatprep.mubr.f32.mxu0 0.0
    %1151 = vmatmul.mubr.f32.gmra.mrb[0].mxu0 %v1084
    %v1152 = vpop.f32.mrb[0].mxu0
    %v1153 = vadd.f32 0.0, %v1152
    %v1154 = vpop.f32.mrb[0].mxu0
    %1155 = vdwg.mxu0
    %1156 = vrot.lane.b32.xlu0 %v294, 96
    %v1157 = vpop.permute.xlu0 %1156
    %v1160 = vsel %vm307, %v999, 0
    %1162 = vmatprep.subr.mxu0 0.0
    %1163 = vmatpush1.msra.mxu0 %v1157
    %1164 = vmatprep.subr.mxu0 0.0
    %1165 = vmatpush1.msra.mxu0 0.0
    %1166 = vmatprep.subr.mxu0 0.0
    %1167 = vmatpush1.msra.mxu0 0.0
    %1168 = vmatprep.subr.mxu0 0.0
    %1169 = vmatpush1.msra.mxu0 0.0
    %1170 = vmatprep.subr.mxu0 0.0
    %1171 = vmatpush1.msra.mxu0 0.0
    %1172 = vmatprep.subr.mxu0 0.0
    %1173 = vmatpush1.msra.mxu0 0.0
    %1174 = vmatprep.subr.mxu0 0.0
    %1175 = vmatpush1.msra.mxu0 0.0
    %1176 = vmatprep.subr.mxu0 0.0
    %1177 = vmatpush1.msra.mxu0 0.0
    %1178 = vmatprep.subr.mxu0 0.0
    %1179 = vmatpush1.msra.mxu0 0.0
    %1180 = vmatprep.subr.mxu0 0.0
    %1181 = vmatpush1.msra.mxu0 0.0
    %1182 = vmatprep.subr.mxu0 0.0
    %1183 = vmatpush1.msra.mxu0 0.0
    %1184 = vmatprep.subr.mxu0 0.0
    %1185 = vmatpush1.msra.mxu0 0.0
    %1186 = vmatprep.subr.mxu0 0.0
    %1187 = vmatpush1.msra.mxu0 0.0
    %1188 = vmatprep.subr.mxu0 0.0
    %1189 = vmatpush1.msra.mxu0 0.0
    %1190 = vmatprep.subr.mxu0 0.0
    %1191 = vmatpush1.msra.mxu0 0.0
    %1192 = vmatprep.subr.mxu0 0.0
    %1193 = vmatpush1.msra.mxu0 0.0
    %1194 = vmatprep.subr.mxu0 0.0
    %1195 = vmatpush1.msra.mxu0 0.0
    %1196 = vmatprep.subr.mxu0 0.0
    %1197 = vmatpush1.msra.mxu0 0.0
    %1198 = vmatprep.subr.mxu0 0.0
    %1199 = vmatpush1.msra.mxu0 0.0
    %1200 = vmatprep.subr.mxu0 0.0
    %1201 = vmatpush1.msra.mxu0 0.0
    %1202 = vmatprep.subr.mxu0 0.0
    %1203 = vmatpush1.msra.mxu0 0.0
    %1204 = vmatprep.subr.mxu0 0.0
    %1205 = vmatpush1.msra.mxu0 0.0
    %1206 = vmatprep.subr.mxu0 0.0
    %1207 = vmatpush1.msra.mxu0 0.0
    %1208 = vmatprep.subr.mxu0 0.0
    %1209 = vmatpush1.msra.mxu0 0.0
    %1210 = vmatprep.subr.mxu0 0.0
    %1211 = vmatpush1.msra.mxu0 0.0
    %1212 = vmatprep.subr.mxu0 0.0
    %1213 = vmatpush1.msra.mxu0 0.0
    %1214 = vmatprep.subr.mxu0 0.0
    %1215 = vmatpush1.msra.mxu0 0.0
    %1216 = vmatprep.subr.mxu0 0.0
    %1217 = vmatpush1.msra.mxu0 0.0
    %1218 = vmatprep.subr.mxu0 0.0
    %1219 = vmatpush1.msra.mxu0 0.0
    %1220 = vmatprep.subr.mxu0 0.0
    %1221 = vmatpush1.msra.mxu0 0.0
    %1222 = vmatprep.subr.mxu0 0.0
    %1223 = vmatpush1.msra.mxu0 0.0
    %1224 = vmatprep.subr.mxu0 0.0
    %1225 = vmatpush1.msra.mxu0 0.0
    %1226 = vmatprep.mubr.f32.mxu0 0.0
    %1227 = vmatmul.mubr.f32.gmra.mrb[0].mxu0 %v1160
    %v1228 = vpop.f32.mrb[0].mxu0
    %v1229 = vadd.f32 0.0, %v1228
    %v1230 = vpop.f32.mrb[0].mxu0
    %1231 = vdwg.mxu0
    %1232 = vrot.lane.b32.xlu0 %v296, 96
    %v1233 = vpop.permute.xlu0 %1232
    %v1236 = vsel %vm307, %v1001, 0
    %1238 = vmatprep.subr.mxu0 0.0
    %1239 = vmatpush1.msra.mxu0 %v1233
    %1240 = vmatprep.subr.mxu0 0.0
    %1241 = vmatpush1.msra.mxu0 0.0
    %1242 = vmatprep.subr.mxu0 0.0
    %1243 = vmatpush1.msra.mxu0 0.0
    %1244 = vmatprep.subr.mxu0 0.0
    %1245 = vmatpush1.msra.mxu0 0.0
    %1246 = vmatprep.subr.mxu0 0.0
    %1247 = vmatpush1.msra.mxu0 0.0
    %1248 = vmatprep.subr.mxu0 0.0
    %1249 = vmatpush1.msra.mxu0 0.0
    %1250 = vmatprep.subr.mxu0 0.0
    %1251 = vmatpush1.msra.mxu0 0.0
    %1252 = vmatprep.subr.mxu0 0.0
    %1253 = vmatpush1.msra.mxu0 0.0
    %1254 = vmatprep.subr.mxu0 0.0
    %1255 = vmatpush1.msra.mxu0 0.0
    %1256 = vmatprep.subr.mxu0 0.0
    %1257 = vmatpush1.msra.mxu0 0.0
    %1258 = vmatprep.subr.mxu0 0.0
    %1259 = vmatpush1.msra.mxu0 0.0
    %1260 = vmatprep.subr.mxu0 0.0
    %1261 = vmatpush1.msra.mxu0 0.0
    %1262 = vmatprep.subr.mxu0 0.0
    %1263 = vmatpush1.msra.mxu0 0.0
    %1264 = vmatprep.subr.mxu0 0.0
    %1265 = vmatpush1.msra.mxu0 0.0
    %1266 = vmatprep.subr.mxu0 0.0
    %1267 = vmatpush1.msra.mxu0 0.0
    %1268 = vmatprep.subr.mxu0 0.0
    %1269 = vmatpush1.msra.mxu0 0.0
    %1270 = vmatprep.subr.mxu0 0.0
    %1271 = vmatpush1.msra.mxu0 0.0
    %1272 = vmatprep.subr.mxu0 0.0
    %1273 = vmatpush1.msra.mxu0 0.0
    %1274 = vmatprep.subr.mxu0 0.0
    %1275 = vmatpush1.msra.mxu0 0.0
    %1276 = vmatprep.subr.mxu0 0.0
    %1277 = vmatpush1.msra.mxu0 0.0
    %1278 = vmatprep.subr.mxu0 0.0
    %1279 = vmatpush1.msra.mxu0 0.0
    %1280 = vmatprep.subr.mxu0 0.0
    %1281 = vmatpush1.msra.mxu0 0.0
    %1282 = vmatprep.subr.mxu0 0.0
    %1283 = vmatpush1.msra.mxu0 0.0
    %1284 = vmatprep.subr.mxu0 0.0
    %1285 = vmatpush1.msra.mxu0 0.0
    %1286 = vmatprep.subr.mxu0 0.0
    %1287 = vmatpush1.msra.mxu0 0.0
    %1288 = vmatprep.subr.mxu0 0.0
    %1289 = vmatpush1.msra.mxu0 0.0
    %1290 = vmatprep.subr.mxu0 0.0
    %1291 = vmatpush1.msra.mxu0 0.0
    %1292 = vmatprep.subr.mxu0 0.0
    %1293 = vmatpush1.msra.mxu0 0.0
    %1294 = vmatprep.subr.mxu0 0.0
    %1295 = vmatpush1.msra.mxu0 0.0
    %1296 = vmatprep.subr.mxu0 0.0
    %1297 = vmatpush1.msra.mxu0 0.0
    %1298 = vmatprep.subr.mxu0 0.0
    %1299 = vmatpush1.msra.mxu0 0.0
    %1300 = vmatprep.subr.mxu0 0.0
    %1301 = vmatpush1.msra.mxu0 0.0
    %1302 = vmatprep.mubr.f32.mxu0 0.0
    %1303 = vmatmul.mubr.f32.gmra.mrb[0].mxu0 %v1236
    %v1304 = vpop.f32.mrb[0].mxu0
    %v1305 = vadd.f32 0.0, %v1304
    %v1306 = vpop.f32.mrb[0].mxu0
    %1307 = vdwg.mxu0
    %1308 = vrot.lane.b32.xlu0 %v298, 96
    %v1309 = vpop.permute.xlu0 %1308
    %v1312 = vsel %vm307, %v1003, 0
    %1314 = vmatprep.subr.mxu0 0.0
    %1315 = vmatpush1.msra.mxu0 %v1309
    %1316 = vmatprep.subr.mxu0 0.0
    %1317 = vmatpush1.msra.mxu0 0.0
    %1318 = vmatprep.subr.mxu0 0.0
    %1319 = vmatpush1.msra.mxu0 0.0
    %1320 = vmatprep.subr.mxu0 0.0
    %1321 = vmatpush1.msra.mxu0 0.0
    %1322 = vmatprep.subr.mxu0 0.0
    %1323 = vmatpush1.msra.mxu0 0.0
    %1324 = vmatprep.subr.mxu0 0.0
    %1325 = vmatpush1.msra.mxu0 0.0
    %1326 = vmatprep.subr.mxu0 0.0
    %1327 = vmatpush1.msra.mxu0 0.0
    %1328 = vmatprep.subr.mxu0 0.0
    %1329 = vmatpush1.msra.mxu0 0.0
    %1330 = vmatprep.subr.mxu0 0.0
    %1331 = vmatpush1.msra.mxu0 0.0
    %1332 = vmatprep.subr.mxu0 0.0
    %1333 = vmatpush1.msra.mxu0 0.0
    %1334 = vmatprep.subr.mxu0 0.0
    %1335 = vmatpush1.msra.mxu0 0.0
    %1336 = vmatprep.subr.mxu0 0.0
    %1337 = vmatpush1.msra.mxu0 0.0
    %1338 = vmatprep.subr.mxu0 0.0
    %1339 = vmatpush1.msra.mxu0 0.0
    %1340 = vmatprep.subr.mxu0 0.0
    %1341 = vmatpush1.msra.mxu0 0.0
    %1342 = vmatprep.subr.mxu0 0.0
    %1343 = vmatpush1.msra.mxu0 0.0
    %1344 = vmatprep.subr.mxu0 0.0
    %1345 = vmatpush1.msra.mxu0 0.0
    %1346 = vmatprep.subr.mxu0 0.0
    %1347 = vmatpush1.msra.mxu0 0.0
    %1348 = vmatprep.subr.mxu0 0.0
    %1349 = vmatpush1.msra.mxu0 0.0
    %1350 = vmatprep.subr.mxu0 0.0
    %1351 = vmatpush1.msra.mxu0 0.0
    %1352 = vmatprep.subr.mxu0 0.0
    %1353 = vmatpush1.msra.mxu0 0.0
    %1354 = vmatprep.subr.mxu0 0.0
    %1355 = vmatpush1.msra.mxu0 0.0
    %1356 = vmatprep.subr.mxu0 0.0
    %1357 = vmatpush1.msra.mxu0 0.0
    %1358 = vmatprep.subr.mxu0 0.0
    %1359 = vmatpush1.msra.mxu0 0.0
    %1360 = vmatprep.subr.mxu0 0.0
    %1361 = vmatpush1.msra.mxu0 0.0
    %1362 = vmatprep.subr.mxu0 0.0
    %1363 = vmatpush1.msra.mxu0 0.0
    %1364 = vmatprep.subr.mxu0 0.0
    %1365 = vmatpush1.msra.mxu0 0.0
    %1366 = vmatprep.subr.mxu0 0.0
    %1367 = vmatpush1.msra.mxu0 0.0
    %1368 = vmatprep.subr.mxu0 0.0
    %1369 = vmatpush1.msra.mxu0 0.0
    %1370 = vmatprep.subr.mxu0 0.0
    %1371 = vmatpush1.msra.mxu0 0.0
    %1372 = vmatprep.subr.mxu0 0.0
    %1373 = vmatpush1.msra.mxu0 0.0
    %1374 = vmatprep.subr.mxu0 0.0
    %1375 = vmatpush1.msra.mxu0 0.0
    %1376 = vmatprep.subr.mxu0 0.0
    %1377 = vmatpush1.msra.mxu0 0.0
    %1378 = vmatprep.mubr.f32.mxu0 0.0
    %1379 = vmatmul.mubr.f32.gmra.mrb[0].mxu0 %v1312
    %v1380 = vpop.f32.mrb[0].mxu0
    %v1381 = vadd.f32 0.0, %v1380
    %v1382 = vpop.f32.mrb[0].mxu0
    %1383 = vdwg.mxu0
    %1384 = vrot.lane.b32.xlu0 %v300, 96
    %v1385 = vpop.permute.xlu0 %1384
    %v1388 = vsel %vm307, %v1005, 0
    %1390 = vmatprep.subr.mxu0 0.0
    %1391 = vmatpush1.msra.mxu0 %v1385
    %1392 = vmatprep.subr.mxu0 0.0
    %1393 = vmatpush1.msra.mxu0 0.0
    %1394 = vmatprep.subr.mxu0 0.0
    %1395 = vmatpush1.msra.mxu0 0.0
    %1396 = vmatprep.subr.mxu0 0.0
    %1397 = vmatpush1.msra.mxu0 0.0
    %1398 = vmatprep.subr.mxu0 0.0
    %1399 = vmatpush1.msra.mxu0 0.0
    %1400 = vmatprep.subr.mxu0 0.0
    %1401 = vmatpush1.msra.mxu0 0.0
    %1402 = vmatprep.subr.mxu0 0.0
    %1403 = vmatpush1.msra.mxu0 0.0
    %1404 = vmatprep.subr.mxu0 0.0
    %1405 = vmatpush1.msra.mxu0 0.0
    %1406 = vmatprep.subr.mxu0 0.0
    %1407 = vmatpush1.msra.mxu0 0.0
    %1408 = vmatprep.subr.mxu0 0.0
    %1409 = vmatpush1.msra.mxu0 0.0
    %1410 = vmatprep.subr.mxu0 0.0
    %1411 = vmatpush1.msra.mxu0 0.0
    %1412 = vmatprep.subr.mxu0 0.0
    %1413 = vmatpush1.msra.mxu0 0.0
    %1414 = vmatprep.subr.mxu0 0.0
    %1415 = vmatpush1.msra.mxu0 0.0
    %1416 = vmatprep.subr.mxu0 0.0
    %1417 = vmatpush1.msra.mxu0 0.0
    %1418 = vmatprep.subr.mxu0 0.0
    %1419 = vmatpush1.msra.mxu0 0.0
    %1420 = vmatprep.subr.mxu0 0.0
    %1421 = vmatpush1.msra.mxu0 0.0
    %1422 = vmatprep.subr.mxu0 0.0
    %1423 = vmatpush1.msra.mxu0 0.0
    %1424 = vmatprep.subr.mxu0 0.0
    %1425 = vmatpush1.msra.mxu0 0.0
    %1426 = vmatprep.subr.mxu0 0.0
    %1427 = vmatpush1.msra.mxu0 0.0
    %1428 = vmatprep.subr.mxu0 0.0
    %1429 = vmatpush1.msra.mxu0 0.0
    %1430 = vmatprep.subr.mxu0 0.0
    %1431 = vmatpush1.msra.mxu0 0.0
    %1432 = vmatprep.subr.mxu0 0.0
    %1433 = vmatpush1.msra.mxu0 0.0
    %1434 = vmatprep.subr.mxu0 0.0
    %1435 = vmatpush1.msra.mxu0 0.0
    %1436 = vmatprep.subr.mxu0 0.0
    %1437 = vmatpush1.msra.mxu0 0.0
    %1438 = vmatprep.subr.mxu0 0.0
    %1439 = vmatpush1.msra.mxu0 0.0
    %1440 = vmatprep.subr.mxu0 0.0
    %1441 = vmatpush1.msra.mxu0 0.0
    %1442 = vmatprep.subr.mxu0 0.0
    %1443 = vmatpush1.msra.mxu0 0.0
    %1444 = vmatprep.subr.mxu0 0.0
    %1445 = vmatpush1.msra.mxu0 0.0
    %1446 = vmatprep.subr.mxu0 0.0
    %1447 = vmatpush1.msra.mxu0 0.0
    %1448 = vmatprep.subr.mxu0 0.0
    %1449 = vmatpush1.msra.mxu0 0.0
    %1450 = vmatprep.subr.mxu0 0.0
    %1451 = vmatpush1.msra.mxu0 0.0
    %1452 = vmatprep.subr.mxu0 0.0
    %1453 = vmatpush1.msra.mxu0 0.0
    %1454 = vmatprep.mubr.f32.mxu0 0.0
    %1455 = vmatmul.mubr.f32.gmra.mrb[0].mxu0 %v1388
    %v1456 = vpop.f32.mrb[0].mxu0
    %v1457 = vadd.f32 0.0, %v1456
    %v1458 = vpop.f32.mrb[0].mxu0
    %1459 = vdwg.mxu0
    %1460 = vrot.lane.b32.xlu0 %v302, 96
    %v1461 = vpop.permute.xlu0 %1460
    %v1464 = vsel %vm307, %v1007, 0
    %1466 = vmatprep.subr.mxu0 0.0
    %1467 = vmatpush1.msra.mxu0 %v1461
    %1468 = vmatprep.subr.mxu0 0.0
    %1469 = vmatpush1.msra.mxu0 0.0
    %1470 = vmatprep.subr.mxu0 0.0
    %1471 = vmatpush1.msra.mxu0 0.0
    %1472 = vmatprep.subr.mxu0 0.0
    %1473 = vmatpush1.msra.mxu0 0.0
    %1474 = vmatprep.subr.mxu0 0.0
    %1475 = vmatpush1.msra.mxu0 0.0
    %1476 = vmatprep.subr.mxu0 0.0
    %1477 = vmatpush1.msra.mxu0 0.0
    %1478 = vmatprep.subr.mxu0 0.0
    %1479 = vmatpush1.msra.mxu0 0.0
    %1480 = vmatprep.subr.mxu0 0.0
    %1481 = vmatpush1.msra.mxu0 0.0
    %1482 = vmatprep.subr.mxu0 0.0
    %1483 = vmatpush1.msra.mxu0 0.0
    %1484 = vmatprep.subr.mxu0 0.0
    %1485 = vmatpush1.msra.mxu0 0.0
    %1486 = vmatprep.subr.mxu0 0.0
    %1487 = vmatpush1.msra.mxu0 0.0
    %1488 = vmatprep.subr.mxu0 0.0
    %1489 = vmatpush1.msra.mxu0 0.0
    %1490 = vmatprep.subr.mxu0 0.0
    %1491 = vmatpush1.msra.mxu0 0.0
    %1492 = vmatprep.subr.mxu0 0.0
    %1493 = vmatpush1.msra.mxu0 0.0
    %1494 = vmatprep.subr.mxu0 0.0
    %1495 = vmatpush1.msra.mxu0 0.0
    %1496 = vmatprep.subr.mxu0 0.0
    %1497 = vmatpush1.msra.mxu0 0.0
    %1498 = vmatprep.subr.mxu0 0.0
    %1499 = vmatpush1.msra.mxu0 0.0
    %1500 = vmatprep.subr.mxu0 0.0
    %1501 = vmatpush1.msra.mxu0 0.0
    %1502 = vmatprep.subr.mxu0 0.0
    %1503 = vmatpush1.msra.mxu0 0.0
    %1504 = vmatprep.subr.mxu0 0.0
    %1505 = vmatpush1.msra.mxu0 0.0
    %1506 = vmatprep.subr.mxu0 0.0
    %1507 = vmatpush1.msra.mxu0 0.0
    %1508 = vmatprep.subr.mxu0 0.0
    %1509 = vmatpush1.msra.mxu0 0.0
    %1510 = vmatprep.subr.mxu0 0.0
    %1511 = vmatpush1.msra.mxu0 0.0
    %1512 = vmatprep.subr.mxu0 0.0
    %1513 = vmatpush1.msra.mxu0 0.0
    %1514 = vmatprep.subr.mxu0 0.0
    %1515 = vmatpush1.msra.mxu0 0.0
    %1516 = vmatprep.subr.mxu0 0.0
    %1517 = vmatpush1.msra.mxu0 0.0
    %1518 = vmatprep.subr.mxu0 0.0
    %1519 = vmatpush1.msra.mxu0 0.0
    %1520 = vmatprep.subr.mxu0 0.0
    %1521 = vmatpush1.msra.mxu0 0.0
    %1522 = vmatprep.subr.mxu0 0.0
    %1523 = vmatpush1.msra.mxu0 0.0
    %1524 = vmatprep.subr.mxu0 0.0
    %1525 = vmatpush1.msra.mxu0 0.0
    %1526 = vmatprep.subr.mxu0 0.0
    %1527 = vmatpush1.msra.mxu0 0.0
    %1528 = vmatprep.subr.mxu0 0.0
    %1529 = vmatpush1.msra.mxu0 0.0
    %1530 = vmatprep.mubr.f32.mxu0 0.0
    %1531 = vmatmul.mubr.f32.gmra.mrb[0].mxu0 %v1464
    %v1532 = vpop.f32.mrb[0].mxu0
    %v1533 = vadd.f32 0.0, %v1532
    %v1534 = vpop.f32.mrb[0].mxu0
    %1535 = vdwg.mxu0
    %1536 = vrot.lane.b32.xlu0 %v304, 96
    %v1537 = vpop.permute.xlu0 %1536
    %v1540 = vsel %vm307, %v1009, 0
    %1542 = vmatprep.subr.mxu0 0.0
    %1543 = vmatpush1.msra.mxu0 %v1537
    %1544 = vmatprep.subr.mxu0 0.0
    %1545 = vmatpush1.msra.mxu0 0.0
    %1546 = vmatprep.subr.mxu0 0.0
    %1547 = vmatpush1.msra.mxu0 0.0
    %1548 = vmatprep.subr.mxu0 0.0
    %1549 = vmatpush1.msra.mxu0 0.0
    %1550 = vmatprep.subr.mxu0 0.0
    %1551 = vmatpush1.msra.mxu0 0.0
    %1552 = vmatprep.subr.mxu0 0.0
    %1553 = vmatpush1.msra.mxu0 0.0
    %1554 = vmatprep.subr.mxu0 0.0
    %1555 = vmatpush1.msra.mxu0 0.0
    %1556 = vmatprep.subr.mxu0 0.0
    %1557 = vmatpush1.msra.mxu0 0.0
    %1558 = vmatprep.subr.mxu0 0.0
    %1559 = vmatpush1.msra.mxu0 0.0
    %1560 = vmatprep.subr.mxu0 0.0
    %1561 = vmatpush1.msra.mxu0 0.0
    %1562 = vmatprep.subr.mxu0 0.0
    %1563 = vmatpush1.msra.mxu0 0.0
    %1564 = vmatprep.subr.mxu0 0.0
    %1565 = vmatpush1.msra.mxu0 0.0
    %1566 = vmatprep.subr.mxu0 0.0
    %1567 = vmatpush1.msra.mxu0 0.0
    %1568 = vmatprep.subr.mxu0 0.0
    %1569 = vmatpush1.msra.mxu0 0.0
    %1570 = vmatprep.subr.mxu0 0.0
    %1571 = vmatpush1.msra.mxu0 0.0
    %1572 = vmatprep.subr.mxu0 0.0
    %1573 = vmatpush1.msra.mxu0 0.0
    %1574 = vmatprep.subr.mxu0 0.0
    %1575 = vmatpush1.msra.mxu0 0.0
    %1576 = vmatprep.subr.mxu0 0.0
    %1577 = vmatpush1.msra.mxu0 0.0
    %1578 = vmatprep.subr.mxu0 0.0
    %1579 = vmatpush1.msra.mxu0 0.0
    %1580 = vmatprep.subr.mxu0 0.0
    %1581 = vmatpush1.msra.mxu0 0.0
    %1582 = vmatprep.subr.mxu0 0.0
    %1583 = vmatpush1.msra.mxu0 0.0
    %1584 = vmatprep.subr.mxu0 0.0
    %1585 = vmatpush1.msra.mxu0 0.0
    %1586 = vmatprep.subr.mxu0 0.0
    %1587 = vmatpush1.msra.mxu0 0.0
    %1588 = vmatprep.subr.mxu0 0.0
    %1589 = vmatpush1.msra.mxu0 0.0
    %1590 = vmatprep.subr.mxu0 0.0
    %1591 = vmatpush1.msra.mxu0 0.0
    %1592 = vmatprep.subr.mxu0 0.0
    %1593 = vmatpush1.msra.mxu0 0.0
    %1594 = vmatprep.subr.mxu0 0.0
    %1595 = vmatpush1.msra.mxu0 0.0
    %1596 = vmatprep.subr.mxu0 0.0
    %1597 = vmatpush1.msra.mxu0 0.0
    %1598 = vmatprep.subr.mxu0 0.0
    %1599 = vmatpush1.msra.mxu0 0.0
    %1600 = vmatprep.subr.mxu0 0.0
    %1601 = vmatpush1.msra.mxu0 0.0
    %1602 = vmatprep.subr.mxu0 0.0
    %1603 = vmatpush1.msra.mxu0 0.0
    %1604 = vmatprep.subr.mxu0 0.0
    %1605 = vmatpush1.msra.mxu0 0.0
    %1606 = vmatprep.mubr.f32.mxu0 0.0
    %1607 = vmatmul.mubr.f32.gmra.mrb[0].mxu0 %v1540
    %v1608 = vpop.f32.mrb[0].mxu0
    %v1609 = vadd.f32 0.0, %v1608
    %v1610 = vpop.f32.mrb[0].mxu0
    %1611 = vdwg.mxu0
    %v1612 = vld [vmem:[%s9] sm:$0xff]
    %v1613 = vld [vmem:[%s9 + $0x8] sm:$0xff]
    %v1615 = vsel %vm307, %v1229, 0
    %v1618 = vsel %vm307, %v1305, 0
    %1620 = vmatprep.subr.mxu0 0.0
    %1621 = vmatpush1.msra.mxu0 %v1613
    %1622 = vmatprep.subr.mxu0 0.0
    %1623 = vmatpush1.msra.mxu0 0.0
    %1624 = vmatprep.subr.mxu0 0.0
    %1625 = vmatpush1.msra.mxu0 0.0
    %1626 = vmatprep.subr.mxu0 0.0
    %1627 = vmatpush1.msra.mxu0 0.0
    %1628 = vmatprep.subr.mxu0 0.0
    %1629 = vmatpush1.msra.mxu0 0.0
    %1630 = vmatprep.subr.mxu0 0.0
    %1631 = vmatpush1.msra.mxu0 0.0
    %1632 = vmatprep.subr.mxu0 0.0
    %1633 = vmatpush1.msra.mxu0 0.0
    %1634 = vmatprep.subr.mxu0 0.0
    %1635 = vmatpush1.msra.mxu0 0.0
    %1636 = vmatprep.subr.mxu0 0.0
    %1637 = vmatpush1.msra.mxu0 0.0
    %1638 = vmatprep.subr.mxu0 0.0
    %1639 = vmatpush1.msra.mxu0 0.0
    %1640 = vmatprep.subr.mxu0 0.0
    %1641 = vmatpush1.msra.mxu0 0.0
    %1642 = vmatprep.subr.mxu0 0.0
    %1643 = vmatpush1.msra.mxu0 0.0
    %1644 = vmatprep.subr.mxu0 0.0
    %1645 = vmatpush1.msra.mxu0 0.0
    %1646 = vmatprep.subr.mxu0 0.0
    %1647 = vmatpush1.msra.mxu0 0.0
    %1648 = vmatprep.subr.mxu0 0.0
    %1649 = vmatpush1.msra.mxu0 0.0
    %1650 = vmatprep.subr.mxu0 0.0
    %1651 = vmatpush1.msra.mxu0 0.0
    %1652 = vmatprep.subr.mxu0 0.0
    %1653 = vmatpush1.msra.mxu0 0.0
    %1654 = vmatprep.subr.mxu0 0.0
    %1655 = vmatpush1.msra.mxu0 0.0
    %1656 = vmatprep.subr.mxu0 0.0
    %1657 = vmatpush1.msra.mxu0 0.0
    %1658 = vmatprep.subr.mxu0 0.0
    %1659 = vmatpush1.msra.mxu0 0.0
    %1660 = vmatprep.subr.mxu0 0.0
    %1661 = vmatpush1.msra.mxu0 0.0
    %1662 = vmatprep.subr.mxu0 0.0
    %1663 = vmatpush1.msra.mxu0 0.0
    %1664 = vmatprep.subr.mxu0 0.0
    %1665 = vmatpush1.msra.mxu0 0.0
    %1666 = vmatprep.subr.mxu0 0.0
    %1667 = vmatpush1.msra.mxu0 0.0
    %1668 = vmatprep.subr.mxu0 0.0
    %1669 = vmatpush1.msra.mxu0 0.0
    %1670 = vmatprep.subr.mxu0 0.0
    %1671 = vmatpush1.msra.mxu0 0.0
    %1672 = vmatprep.subr.mxu0 0.0
    %1673 = vmatpush1.msra.mxu0 0.0
    %1674 = vmatprep.subr.mxu0 0.0
    %1675 = vmatpush1.msra.mxu0 0.0
    %1676 = vmatprep.subr.mxu0 0.0
    %1677 = vmatpush1.msra.mxu0 0.0
    %1678 = vmatprep.subr.mxu0 0.0
    %1679 = vmatpush1.msra.mxu0 0.0
    %1680 = vmatprep.subr.mxu0 0.0
    %1681 = vmatpush1.msra.mxu0 0.0
    %1682 = vmatprep.subr.mxu0 0.0
    %1683 = vmatpush1.msra.mxu0 0.0
    %1684 = vmatprep.mubr.f32.mxu0 0.0
    %1685 = vmatmul.mubr.f32.gmra.mrb[0].mxu0 %v1615
    %v1686 = vpop.f32.mrb[0].mxu0
    %v1687 = vadd.f32 0.0, %v1686
    %v1688 = vpop.f32.mrb[0].mxu0
    %1689 = vmatprep.mubr.f32.mxu0 0.0
    %1690 = vmatmul.mubr.f32.gmra.mrb[0].mxu0 %v1618
    %v1691 = vpop.f32.mrb[0].mxu0
    %v1692 = vadd.f32 0.0, %v1691
    %v1693 = vpop.f32.mrb[0].mxu0
    %1694 = vdwg.mxu0
    %v1696 = vsel %vm307, %v1080, 0
    %v1699 = vsel %vm307, %v1153, 0
    %1701 = vmatprep.subr.mxu0 0.0
    %1702 = vmatpush1.msra.mxu0 %v1612
    %1703 = vmatprep.subr.mxu0 0.0
    %1704 = vmatpush1.msra.mxu0 0.0
    %1705 = vmatprep.subr.mxu0 0.0
    %1706 = vmatpush1.msra.mxu0 0.0
    %1707 = vmatprep.subr.mxu0 0.0
    %1708 = vmatpush1.msra.mxu0 0.0
    %1709 = vmatprep.subr.mxu0 0.0
    %1710 = vmatpush1.msra.mxu0 0.0
    %1711 = vmatprep.subr.mxu0 0.0
    %1712 = vmatpush1.msra.mxu0 0.0
    %1713 = vmatprep.subr.mxu0 0.0
    %1714 = vmatpush1.msra.mxu0 0.0
    %1715 = vmatprep.subr.mxu0 0.0
    %1716 = vmatpush1.msra.mxu0 0.0
    %1717 = vmatprep.subr.mxu0 0.0
    %1718 = vmatpush1.msra.mxu0 0.0
    %1719 = vmatprep.subr.mxu0 0.0
    %1720 = vmatpush1.msra.mxu0 0.0
    %1721 = vmatprep.subr.mxu0 0.0
    %1722 = vmatpush1.msra.mxu0 0.0
    %1723 = vmatprep.subr.mxu0 0.0
    %1724 = vmatpush1.msra.mxu0 0.0
    %1725 = vmatprep.subr.mxu0 0.0
    %1726 = vmatpush1.msra.mxu0 0.0
    %1727 = vmatprep.subr.mxu0 0.0
    %1728 = vmatpush1.msra.mxu0 0.0
    %1729 = vmatprep.subr.mxu0 0.0
    %1730 = vmatpush1.msra.mxu0 0.0
    %1731 = vmatprep.subr.mxu0 0.0
    %1732 = vmatpush1.msra.mxu0 0.0
    %1733 = vmatprep.subr.mxu0 0.0
    %1734 = vmatpush1.msra.mxu0 0.0
    %1735 = vmatprep.subr.mxu0 0.0
    %1736 = vmatpush1.msra.mxu0 0.0
    %1737 = vmatprep.subr.mxu0 0.0
    %1738 = vmatpush1.msra.mxu0 0.0
    %1739 = vmatprep.subr.mxu0 0.0
    %1740 = vmatpush1.msra.mxu0 0.0
    %1741 = vmatprep.subr.mxu0 0.0
    %1742 = vmatpush1.msra.mxu0 0.0
    %1743 = vmatprep.subr.mxu0 0.0
    %1744 = vmatpush1.msra.mxu0 0.0
    %1745 = vmatprep.subr.mxu0 0.0
    %1746 = vmatpush1.msra.mxu0 0.0
    %1747 = vmatprep.subr.mxu0 0.0
    %1748 = vmatpush1.msra.mxu0 0.0
    %1749 = vmatprep.subr.mxu0 0.0
    %1750 = vmatpush1.msra.mxu0 0.0
    %1751 = vmatprep.subr.mxu0 0.0
    %1752 = vmatpush1.msra.mxu0 0.0
    %1753 = vmatprep.subr.mxu0 0.0
    %1754 = vmatpush1.msra.mxu0 0.0
    %1755 = vmatprep.subr.mxu0 0.0
    %1756 = vmatpush1.msra.mxu0 0.0
    %1757 = vmatprep.subr.mxu0 0.0
    %1758 = vmatpush1.msra.mxu0 0.0
    %1759 = vmatprep.subr.mxu0 0.0
    %1760 = vmatpush1.msra.mxu0 0.0
    %1761 = vmatprep.subr.mxu0 0.0
    %1762 = vmatpush1.msra.mxu0 0.0
    %1763 = vmatprep.subr.mxu0 0.0
    %1764 = vmatpush1.msra.mxu0 0.0
    %1765 = vmatprep.mubr.f32.mxu0 0.0
    %1766 = vmatmul.mubr.f32.gmra.mrb[0].mxu0 %v1696
    %v1767 = vpop.f32.mrb[0].mxu0
    %v1768 = vadd.f32 %v1687, %v1767
    %v1769 = vpop.f32.mrb[0].mxu0
    %1770 = vmatprep.mubr.f32.mxu0 0.0
    %1771 = vmatmul.mubr.f32.gmra.mrb[0].mxu0 %v1699
    %v1772 = vpop.f32.mrb[0].mxu0
    %v1773 = vadd.f32 %v1692, %v1772
    %v1774 = vpop.f32.mrb[0].mxu0
    %1775 = vdwg.mxu0
    %v1776 = vld [vmem:[%s9 + $0x10] sm:$0xff]
    %v1778 = vsel %vm307, %v1381, 0
    %v1781 = vsel %vm307, %v1457, 0
    %1783 = vmatprep.subr.mxu0 0.0
    %1784 = vmatpush1.msra.mxu0 %v1776
    %1785 = vmatprep.subr.mxu0 0.0
    %1786 = vmatpush1.msra.mxu0 0.0
    %1787 = vmatprep.subr.mxu0 0.0
    %1788 = vmatpush1.msra.mxu0 0.0
    %1789 = vmatprep.subr.mxu0 0.0
    %1790 = vmatpush1.msra.mxu0 0.0
    %1791 = vmatprep.subr.mxu0 0.0
    %1792 = vmatpush1.msra.mxu0 0.0
    %1793 = vmatprep.subr.mxu0 0.0
    %1794 = vmatpush1.msra.mxu0 0.0
    %1795 = vmatprep.subr.mxu0 0.0
    %1796 = vmatpush1.msra.mxu0 0.0
    %1797 = vmatprep.subr.mxu0 0.0
    %1798 = vmatpush1.msra.mxu0 0.0
    %1799 = vmatprep.subr.mxu0 0.0
    %1800 = vmatpush1.msra.mxu0 0.0
    %1801 = vmatprep.subr.mxu0 0.0
    %1802 = vmatpush1.msra.mxu0 0.0
    %1803 = vmatprep.subr.mxu0 0.0
    %1804 = vmatpush1.msra.mxu0 0.0
    %1805 = vmatprep.subr.mxu0 0.0
    %1806 = vmatpush1.msra.mxu0 0.0
    %1807 = vmatprep.subr.mxu0 0.0
    %1808 = vmatpush1.msra.mxu0 0.0
    %1809 = vmatprep.subr.mxu0 0.0
    %1810 = vmatpush1.msra.mxu0 0.0
    %1811 = vmatprep.subr.mxu0 0.0
    %1812 = vmatpush1.msra.mxu0 0.0
    %1813 = vmatprep.subr.mxu0 0.0
    %1814 = vmatpush1.msra.mxu0 0.0
    %1815 = vmatprep.subr.mxu0 0.0
    %1816 = vmatpush1.msra.mxu0 0.0
    %1817 = vmatprep.subr.mxu0 0.0
    %1818 = vmatpush1.msra.mxu0 0.0
    %1819 = vmatprep.subr.mxu0 0.0
    %1820 = vmatpush1.msra.mxu0 0.0
    %1821 = vmatprep.subr.mxu0 0.0
    %1822 = vmatpush1.msra.mxu0 0.0
    %1823 = vmatprep.subr.mxu0 0.0
    %1824 = vmatpush1.msra.mxu0 0.0
    %1825 = vmatprep.subr.mxu0 0.0
    %1826 = vmatpush1.msra.mxu0 0.0
    %1827 = vmatprep.subr.mxu0 0.0
    %1828 = vmatpush1.msra.mxu0 0.0
    %1829 = vmatprep.subr.mxu0 0.0
    %1830 = vmatpush1.msra.mxu0 0.0
    %1831 = vmatprep.subr.mxu0 0.0
    %1832 = vmatpush1.msra.mxu0 0.0
    %1833 = vmatprep.subr.mxu0 0.0
    %1834 = vmatpush1.msra.mxu0 0.0
    %1835 = vmatprep.subr.mxu0 0.0
    %1836 = vmatpush1.msra.mxu0 0.0
    %1837 = vmatprep.subr.mxu0 0.0
    %1838 = vmatpush1.msra.mxu0 0.0
    %1839 = vmatprep.subr.mxu0 0.0
    %1840 = vmatpush1.msra.mxu0 0.0
    %1841 = vmatprep.subr.mxu0 0.0
    %1842 = vmatpush1.msra.mxu0 0.0
    %1843 = vmatprep.subr.mxu0 0.0
    %1844 = vmatpush1.msra.mxu0 0.0
    %1845 = vmatprep.subr.mxu0 0.0
    %1846 = vmatpush1.msra.mxu0 0.0
    %1847 = vmatprep.mubr.f32.mxu0 0.0
    %1848 = vmatmul.mubr.f32.gmra.mrb[0].mxu0 %v1778
    %v1849 = vpop.f32.mrb[0].mxu0
    %v1850 = vadd.f32 0.0, %v1849
    %v1851 = vpop.f32.mrb[0].mxu0
    %1852 = vmatprep.mubr.f32.mxu0 0.0
    %1853 = vmatmul.mubr.f32.gmra.mrb[0].mxu0 %v1781
    %v1854 = vpop.f32.mrb[0].mxu0
    %v1855 = vadd.f32 0.0, %v1854
    %v1856 = vpop.f32.mrb[0].mxu0
    %1857 = vdwg.mxu0
    %v1858 = vadd.f32 %v1768, %v1850
    %v1859 = vadd.f32 %v1773, %v1855
    %v1860 = vld [vmem:[%s9 + $0x18] sm:$0xff]
    %v1862 = vsel %vm307, %v1533, 0
    %v1865 = vsel %vm307, %v1609, 0
    %1867 = vmatprep.subr.mxu0 0.0
    %1868 = vmatpush1.msra.mxu0 %v1860
    %1869 = vmatprep.subr.mxu0 0.0
    %1870 = vmatpush1.msra.mxu0 0.0
    %1871 = vmatprep.subr.mxu0 0.0
    %1872 = vmatpush1.msra.mxu0 0.0
    %1873 = vmatprep.subr.mxu0 0.0
    %1874 = vmatpush1.msra.mxu0 0.0
    %1875 = vmatprep.subr.mxu0 0.0
    %1876 = vmatpush1.msra.mxu0 0.0
    %1877 = vmatprep.subr.mxu0 0.0
    %1878 = vmatpush1.msra.mxu0 0.0
    %1879 = vmatprep.subr.mxu0 0.0
    %1880 = vmatpush1.msra.mxu0 0.0
    %1881 = vmatprep.subr.mxu0 0.0
    %1882 = vmatpush1.msra.mxu0 0.0
    %1883 = vmatprep.subr.mxu0 0.0
    %1884 = vmatpush1.msra.mxu0 0.0
    %1885 = vmatprep.subr.mxu0 0.0
    %1886 = vmatpush1.msra.mxu0 0.0
    %1887 = vmatprep.subr.mxu0 0.0
    %1888 = vmatpush1.msra.mxu0 0.0
    %1889 = vmatprep.subr.mxu0 0.0
    %1890 = vmatpush1.msra.mxu0 0.0
    %1891 = vmatprep.subr.mxu0 0.0
    %1892 = vmatpush1.msra.mxu0 0.0
    %1893 = vmatprep.subr.mxu0 0.0
    %1894 = vmatpush1.msra.mxu0 0.0
    %1895 = vmatprep.subr.mxu0 0.0
    %1896 = vmatpush1.msra.mxu0 0.0
    %1897 = vmatprep.subr.mxu0 0.0
    %1898 = vmatpush1.msra.mxu0 0.0
    %1899 = vmatprep.subr.mxu0 0.0
    %1900 = vmatpush1.msra.mxu0 0.0
    %1901 = vmatprep.subr.mxu0 0.0
    %1902 = vmatpush1.msra.mxu0 0.0
    %1903 = vmatprep.subr.mxu0 0.0
    %1904 = vmatpush1.msra.mxu0 0.0
    %1905 = vmatprep.subr.mxu0 0.0
    %1906 = vmatpush1.msra.mxu0 0.0
    %1907 = vmatprep.subr.mxu0 0.0
    %1908 = vmatpush1.msra.mxu0 0.0
    %1909 = vmatprep.subr.mxu0 0.0
    %1910 = vmatpush1.msra.mxu0 0.0
    %1911 = vmatprep.subr.mxu0 0.0
    %1912 = vmatpush1.msra.mxu0 0.0
    %1913 = vmatprep.subr.mxu0 0.0
    %1914 = vmatpush1.msra.mxu0 0.0
    %1915 = vmatprep.subr.mxu0 0.0
    %1916 = vmatpush1.msra.mxu0 0.0
    %1917 = vmatprep.subr.mxu0 0.0
    %1918 = vmatpush1.msra.mxu0 0.0
    %1919 = vmatprep.subr.mxu0 0.0
    %1920 = vmatpush1.msra.mxu0 0.0
    %1921 = vmatprep.subr.mxu0 0.0
    %1922 = vmatpush1.msra.mxu0 0.0
    %1923 = vmatprep.subr.mxu0 0.0
    %1924 = vmatpush1.msra.mxu0 0.0
    %1925 = vmatprep.subr.mxu0 0.0
    %1926 = vmatpush1.msra.mxu0 0.0
    %1927 = vmatprep.subr.mxu0 0.0
    %1928 = vmatpush1.msra.mxu0 0.0
    %1929 = vmatprep.subr.mxu0 0.0
    %1930 = vmatpush1.msra.mxu0 0.0
    %1931 = vmatprep.mubr.f32.mxu0 0.0
    %1932 = vmatmul.mubr.f32.gmra.mrb[0].mxu0 %v1862
    %v1933 = vpop.f32.mrb[0].mxu0
    %v1934 = vadd.f32 0.0, %v1933
    %v1935 = vpop.f32.mrb[0].mxu0
    %1936 = vmatprep.mubr.f32.mxu0 0.0
    %1937 = vmatmul.mubr.f32.gmra.mrb[0].mxu0 %v1865
    %v1938 = vpop.f32.mrb[0].mxu0
    %v1939 = vadd.f32 0.0, %v1938
    %v1940 = vpop.f32.mrb[0].mxu0
    %1941 = vdwg.mxu0
    %v1942 = vadd.f32 %v1858, %v1934
    %v1943 = vadd.f32 %v1859, %v1939
    %v1944 = vld [vmem:[%s10] sm:$0x1]
    %v1946 = vlaneseq
    %v1947 = vshrl.u32 %v1946, 7
    %v1948 = vsub.s32 0, %v1947
    %v1949 = vrot.slane %v1944, %v1948
    %v1951 = vadd.f32 %v1942, %v1949
    %v1952 = vadd.f32 %v1943, %v1949
    %v1953 = vmax.f32 %v1951, 0.0
    %v1954 = vmax.f32 %v1952, 0.0
    %v1955 = vadd.f32 %v1953, %v109
    %v1956 = vadd.f32 %v1954, %v110
    %v1957 = vld [vmem:[%s11] sm:$0xff]
    %v1958 = vld [vmem:[%s11 + $0x8] sm:$0xff]
    %v1959 = vld [vmem:[%s11 + $0x10] sm:$0xff]
    %v1960 = vld [vmem:[%s11 + $0x18] sm:$0xff]
    %v1961 = vld [vmem:[%s12] sm:$0x1]
    %v1963 = vlaneseq
    %v1964 = vshrl.u32 %v1963, 7
    %v1965 = vsub.s32 0, %v1964
    %v1966 = vrot.slane %v1961, %v1965
    %v1969 = vsel %vm67, %v1955, 0
    %v1972 = vsel %vm67, %v1956, 0
    %1974 = vmatprep.subr.mxu0 0.0
    %1975 = vmatpush1.msra.mxu0 %v1957
    %1976 = vmatprep.subr.mxu0 0.0
    %1977 = vmatpush1.msra.mxu0 %v1958
    %1978 = vmatprep.subr.mxu0 0.0
    %1979 = vmatpush1.msra.mxu0 %v1959
    %1980 = vmatprep.subr.mxu0 0.0
    %1981 = vmatpush1.msra.mxu0 %v1960
    %1982 = vmatprep.subr.mxu0 0.0
    %1983 = vmatpush1.msra.mxu0 0.0
    %1984 = vmatprep.subr.mxu0 0.0
    %1985 = vmatpush1.msra.mxu0 0.0
    %1986 = vmatprep.subr.mxu0 0.0
    %1987 = vmatpush1.msra.mxu0 0.0
    %1988 = vmatprep.subr.mxu0 0.0
    %1989 = vmatpush1.msra.mxu0 0.0
    %1990 = vmatprep.subr.mxu0 0.0
    %1991 = vmatpush1.msra.mxu0 0.0
    %1992 = vmatprep.subr.mxu0 0.0
    %1993 = vmatpush1.msra.mxu0 0.0
    %1994 = vmatprep.subr.mxu0 0.0
    %1995 = vmatpush1.msra.mxu0 0.0
    %1996 = vmatprep.subr.mxu0 0.0
    %1997 = vmatpush1.msra.mxu0 0.0
    %1998 = vmatprep.subr.mxu0 0.0
    %1999 = vmatpush1.msra.mxu0 0.0
    %2000 = vmatprep.subr.mxu0 0.0
    %2001 = vmatpush1.msra.mxu0 0.0
    %2002 = vmatprep.subr.mxu0 0.0
    %2003 = vmatpush1.msra.mxu0 0.0
    %2004 = vmatprep.subr.mxu0 0.0
    %2005 = vmatpush1.msra.mxu0 0.0
    %2006 = vmatprep.subr.mxu0 0.0
    %2007 = vmatpush1.msra.mxu0 0.0
    %2008 = vmatprep.subr.mxu0 0.0
    %2009 = vmatpush1.msra.mxu0 0.0
    %2010 = vmatprep.subr.mxu0 0.0
    %2011 = vmatpush1.msra.mxu0 0.0
    %2012 = vmatprep.subr.mxu0 0.0
    %2013 = vmatpush1.msra.mxu0 0.0
    %2014 = vmatprep.subr.mxu0 0.0
    %2015 = vmatpush1.msra.mxu0 0.0
    %2016 = vmatprep.subr.mxu0 0.0
    %2017 = vmatpush1.msra.mxu0 0.0
    %2018 = vmatprep.subr.mxu0 0.0
    %2019 = vmatpush1.msra.mxu0 0.0
    %2020 = vmatprep.subr.mxu0 0.0
    %2021 = vmatpush1.msra.mxu0 0.0
    %2022 = vmatprep.subr.mxu0 0.0
    %2023 = vmatpush1.msra.mxu0 0.0
    %2024 = vmatprep.subr.mxu0 0.0
    %2025 = vmatpush1.msra.mxu0 0.0
    %2026 = vmatprep.subr.mxu0 0.0
    %2027 = vmatpush1.msra.mxu0 0.0
    %2028 = vmatprep.subr.mxu0 0.0
    %2029 = vmatpush1.msra.mxu0 0.0
    %2030 = vmatprep.subr.mxu0 0.0
    %2031 = vmatpush1.msra.mxu0 0.0
    %2032 = vmatprep.subr.mxu0 0.0
    %2033 = vmatpush1.msra.mxu0 0.0
    %2034 = vmatprep.subr.mxu0 0.0
    %2035 = vmatpush1.msra.mxu0 0.0
    %2036 = vmatprep.subr.mxu0 0.0
    %2037 = vmatpush1.msra.mxu0 0.0
    %2038 = vmatprep.mubr.f32.mxu0 0.0
    %2039 = vmatmul.mubr.f32.gmra.mrb[0].mxu0 %v1969
    %v2040 = vpop.f32.mrb[0].mxu0
    %v2041 = vadd.f32 %v1966, %v2040
    %v2042 = vpop.f32.mrb[0].mxu0
    %2043 = vmatprep.mubr.f32.mxu0 0.0
    %2044 = vmatmul.mubr.f32.gmra.mrb[0].mxu0 %v1972
    %v2045 = vpop.f32.mrb[0].mxu0
    %v2046 = vadd.f32 %v1966, %v2045
    %v2047 = vpop.f32.mrb[0].mxu0
    %2048 = vdwg.mxu0
    %v2049 = vmax.f32 %v2041, 0.0
    %v2050 = vmax.f32 %v2046, 0.0
    %v2051 = vld [vmem:[%s13] sm:$0xff]
    %v2052 = vld [vmem:[%s13 + $0x8] sm:$0xff]
    %v2053 = vld [vmem:[%s13 + $0x10] sm:$0xff]
    %v2054 = vld [vmem:[%s13 + $0x18] sm:$0xff]
    %v2055 = vld [vmem:[%s13 + $0x20] sm:$0xff]
    %v2056 = vld [vmem:[%s13 + $0x28] sm:$0xff]
    %v2057 = vld [vmem:[%s13 + $0x30] sm:$0xff]
    %v2058 = vld [vmem:[%s13 + $0x38] sm:$0xff]
    %v2059 = vld [vmem:[%s13 + $0x40] sm:$0xff]
    %v2060 = vld [vmem:[%s13 + $0x48] sm:$0xff]
    %v2061 = vld [vmem:[%s13 + $0x50] sm:$0xff]
    %v2062 = vld [vmem:[%s13 + $0x58] sm:$0xff]
    %v2063 = vld [vmem:[%s13 + $0x60] sm:$0xff]
    %v2064 = vld [vmem:[%s13 + $0x68] sm:$0xff]
    %v2065 = vld [vmem:[%s13 + $0x70] sm:$0xff]
    %v2066 = vld [vmem:[%s13 + $0x78] sm:$0xff]
    %v2067 = vld [vmem:[%s14] sm:$0x1]
    %v2069 = vlaneseq
    %v2070 = vshrl.u32 %v2069, 7
    %v2071 = vsub.s32 0, %v2070
    %v2072 = vrot.slane %v2067, %v2071
    %2074 = vmatprep.subr.mxu0 0.0
    %2075 = vmatpush1.msra.mxu0 %v2051
    %2076 = vmatprep.subr.mxu0 0.0
    %2077 = vmatpush1.msra.mxu0 %v2052
    %2078 = vmatprep.subr.mxu0 0.0
    %2079 = vmatpush1.msra.mxu0 %v2053
    %2080 = vmatprep.subr.mxu0 0.0
    %2081 = vmatpush1.msra.mxu0 %v2054
    %2082 = vmatprep.subr.mxu0 0.0
    %2083 = vmatpush1.msra.mxu0 %v2055
    %2084 = vmatprep.subr.mxu0 0.0
    %2085 = vmatpush1.msra.mxu0 %v2056
    %2086 = vmatprep.subr.mxu0 0.0
    %2087 = vmatpush1.msra.mxu0 %v2057
    %2088 = vmatprep.subr.mxu0 0.0
    %2089 = vmatpush1.msra.mxu0 %v2058
    %2090 = vmatprep.subr.mxu0 0.0
    %2091 = vmatpush1.msra.mxu0 %v2059
    %2092 = vmatprep.subr.mxu0 0.0
    %2093 = vmatpush1.msra.mxu0 %v2060
    %2094 = vmatprep.subr.mxu0 0.0
    %2095 = vmatpush1.msra.mxu0 %v2061
    %2096 = vmatprep.subr.mxu0 0.0
    %2097 = vmatpush1.msra.mxu0 %v2062
    %2098 = vmatprep.subr.mxu0 0.0
    %2099 = vmatpush1.msra.mxu0 %v2063
    %2100 = vmatprep.subr.mxu0 0.0
    %2101 = vmatpush1.msra.mxu0 %v2064
    %2102 = vmatprep.subr.mxu0 0.0
    %2103 = vmatpush1.msra.mxu0 %v2065
    %2104 = vmatprep.subr.mxu0 0.0
    %2105 = vmatpush1.msra.mxu0 %v2066
    %2106 = vmatprep.subr.mxu0 0.0
    %2107 = vmatpush1.msra.mxu0 0.0
    %2108 = vmatprep.subr.mxu0 0.0
    %2109 = vmatpush1.msra.mxu0 0.0
    %2110 = vmatprep.subr.mxu0 0.0
    %2111 = vmatpush1.msra.mxu0 0.0
    %2112 = vmatprep.subr.mxu0 0.0
    %2113 = vmatpush1.msra.mxu0 0.0
    %2114 = vmatprep.subr.mxu0 0.0
    %2115 = vmatpush1.msra.mxu0 0.0
    %2116 = vmatprep.subr.mxu0 0.0
    %2117 = vmatpush1.msra.mxu0 0.0
    %2118 = vmatprep.subr.mxu0 0.0
    %2119 = vmatpush1.msra.mxu0 0.0
    %2120 = vmatprep.subr.mxu0 0.0
    %2121 = vmatpush1.msra.mxu0 0.0
    %2122 = vmatprep.subr.mxu0 0.0
    %2123 = vmatpush1.msra.mxu0 0.0
    %2124 = vmatprep.subr.mxu0 0.0
    %2125 = vmatpush1.msra.mxu0 0.0
    %2126 = vmatprep.subr.mxu0 0.0
    %2127 = vmatpush1.msra.mxu0 0.0
    %2128 = vmatprep.subr.mxu0 0.0
    %2129 = vmatpush1.msra.mxu0 0.0
    %2130 = vmatprep.subr.mxu0 0.0
    %2131 = vmatpush1.msra.mxu0 0.0
    %2132 = vmatprep.subr.mxu0 0.0
    %2133 = vmatpush1.msra.mxu0 0.0
    %2134 = vmatprep.subr.mxu0 0.0
    %2135 = vmatpush1.msra.mxu0 0.0
    %2136 = vmatprep.subr.mxu0 0.0
    %2137 = vmatpush1.msra.mxu0 0.0
    %2138 = vmatprep.mubr.f32.mxu0 0.0
    %2139 = vmatmul.mubr.f32.gmra.mrb[0].mxu0 %v2049
    %v2140 = vpop.f32.mrb[0].mxu0
    %v2141 = vadd.f32 %v2072, %v2140
    %v2142 = vpop.f32.mrb[0].mxu0
    %2143 = vmatprep.mubr.f32.mxu0 0.0
    %2144 = vmatmul.mubr.f32.gmra.mrb[0].mxu0 %v2050
    %v2145 = vpop.f32.mrb[0].mxu0
    %v2146 = vadd.f32 %v2072, %v2145
    %v2147 = vpop.f32.mrb[0].mxu0
    %2148 = vdwg.mxu0
    %v2149 = vmax.f32 %v2141, 0.0
    %v2150 = vmax.f32 %v2146, 0.0
    %v2151 = vld [vmem:[%s15] sm:$0x1]
    %v2152 = vld [vmem:[%s16] sm:$0x1]
    %v2153 = vsel %vm67, %v2149, 0.0
    %2154 = vadd.xlane.f32.xlu0 %v2153
    %v2155 = vpop.xlane.xlu0 %2154
    %v2156 = vsel %vm67, %v2150, 0.0
    %2157 = vadd.xlane.f32.xlu0 %v2156
    %v2158 = vpop.xlane.xlu0 %2157
    %v2159 = vmul.f32 %v2155, %v74
    %v2160 = vmul.f32 %v2158, %v74
    %v2161 = vsub.f32 %v2149, %v2159
    %v2162 = vsub.f32 %v2150, %v2160
    %v2163 = vmul.f32 %v2161, %v2161
    %v2164 = vmul.f32 %v2162, %v2162
    %v2165 = vsel %vm67, %v2163, 0.0
    %2166 = vadd.xlane.f32.xlu0 %v2165
    %v2167 = vpop.xlane.xlu0 %2166
    %v2168 = vsel %vm67, %v2164, 0.0
    %2169 = vadd.xlane.f32.xlu0 %v2168
    %v2170 = vpop.xlane.xlu0 %2169
    %v2171 = vmul.f32 %v2167, %v74
    %v2172 = vmul.f32 %v2170, %v74
    %v2173 = vadd.f32 %v2171, 1e-05
    %v2174 = vadd.f32 %v2172, 1e-05
    %v2175 = vrsqrt.pop %v2173
    %v2176 = vrsqrt.pop %v2174
    %v2177 = vmul.f32 %v2161, %v2175
    %v2178 = vmul.f32 %v2162, %v2176
    %v2180 = vlaneseq
    %v2181 = vshrl.u32 %v2180, 7
    %v2182 = vsub.s32 0, %v2181
    %v2183 = vrot.slane %v2151, %v2182
    %v2185 = vmul.f32 %v2177, %v2183
    %v2186 = vmul.f32 %v2178, %v2183
    %v2188 = vlaneseq
    %v2189 = vshrl.u32 %v2188, 7
    %v2190 = vsub.s32 0, %v2189
    %v2191 = vrot.slane %v2152, %v2190
    %v2193 = vadd.f32 %v2185, %v2191
    %v2194 = vadd.f32 %v2186, %v2191
    %2195 = vst.msk [vmem:[#allocation2] sm:$0xff] %vm67, %v2193
    %2196 = vst.msk [vmem:[#allocation2 + $0x8] sm:$0xff] %vm67, %v2194
    // Predicated region
    $region70: #{tpu_custom_call.1} parent=1 // pred_check
      _
    $region71: #{tpu_custom_call.1} parent=1 // pred_check_branch
      %2198 = sbr.rel (0) target = $region73
    $region72: #{tpu_custom_call.1} parent=1 // pred_region
      %s2200 = ssub.s32 256, 256
      %2201 = vsyncadd [#allocation3], %s2200
      %s2202 = sshll.u32 [#allocation2], 4
      %s2203 = int_to_ptr.vmem [resolvable:$true] %s2202
      %2208 = dma.vmem_to_hbm [thread:$0]  %s2203, 256, %s17, [#allocation3], 128, 128, 8
    $region73: #{tpu_custom_call.1} parent=1 // pred_fallthru
      _
    // Predicated region
    $region74: #{tpu_custom_call.1} parent=1 // pred_check
      _
    $region75: #{tpu_custom_call.1} parent=1 // pred_check_branch
      %2210 = sbr.rel (0) target = $region77
    $region76: #{tpu_custom_call.1} parent=1 // pred_region
      %s2212 = ssub.s32 256, 256
      %2213 = vsyncadd [#allocation5], %s2212
      %s2214 = sshll.u32 [#allocation4], 4
      %s2215 = int_to_ptr.vmem [resolvable:$true] %s2214
      %2220 = dma.vmem_to_hbm [thread:$0]  %s2215, 256, %s18, [#allocation5], 128, 128, 8
    $region77: #{tpu_custom_call.1} parent=1 // pred_fallthru
      _
    // Predicated region
    $region78: #{tpu_custom_call.1} parent=1 // pred_check
      _
    $region79: #{tpu_custom_call.1} parent=1 // pred_check_branch
      %2222 = sbr.rel (0) target = $region81
    $region80: #{tpu_custom_call.1} parent=1 // pred_region
      %s2224 = ssub.s32 256, 256
      %2225 = vsyncadd [#allocation5], %s2224
      %s2226 = sshll.u32 [#allocation6], 4
      %s2227 = int_to_ptr.vmem [resolvable:$true] %s2226
      %2232 = dma.vmem_to_hbm [thread:$0]  %s2227, 256, %s19, [#allocation5], 128, 128, 8
    $region81: #{tpu_custom_call.1} parent=1 // pred_fallthru
      _
    // Predicated region
    $region82: #{tpu_custom_call.1} parent=1 // pred_check
      _
    $region83: #{tpu_custom_call.1} parent=1 // pred_check_branch
      %2234 = sbr.rel (0) target = $region85
    $region84: #{tpu_custom_call.1} parent=1 // pred_region
      %s2236 = ssub.s32 256, 256
      %2237 = vsyncadd [#allocation8], %s2236
      %s2238 = sshll.u32 [#allocation7], 4
      %s2239 = int_to_ptr.vmem [resolvable:$true] %s2238
      %2244 = dma.vmem_to_hbm [thread:$0]  %s2239, 256, %s20, [#allocation8], 128, 128, 8
    $region85: #{tpu_custom_call.1} parent=1 // pred_fallthru
      _
    // Predicated region
    $region86: #{tpu_custom_call.1} parent=1 // pred_check
      _
    $region87: #{tpu_custom_call.1} parent=1 // pred_check_branch
      %2246 = sbr.rel (0) target = $region89
    $region88: #{tpu_custom_call.1} parent=1 // pred_region
      %2247 = dma.done [#allocation3], 256
    $region89: #{tpu_custom_call.1} parent=1 // pred_fallthru
      _
    // Predicated region
    $region90: #{tpu_custom_call.1} parent=1 // pred_check
      _
    $region91: #{tpu_custom_call.1} parent=1 // pred_check_branch
      %2249 = sbr.rel (0) target = $region93
    $region92: #{tpu_custom_call.1} parent=1 // pred_region
      %2250 = dma.done [#allocation5], 256
    $region93: #{tpu_custom_call.1} parent=1 // pred_fallthru
      _
    // Predicated region
    $region94: #{tpu_custom_call.1} parent=1 // pred_check
      _
    $region95: #{tpu_custom_call.1} parent=1 // pred_check_branch
      %2252 = sbr.rel (0) target = $region97
    $region96: #{tpu_custom_call.1} parent=1 // pred_region
      %2253 = dma.done [#allocation5], 256
    $region97: #{tpu_custom_call.1} parent=1 // pred_fallthru
      _
    // Predicated region
    $region98: #{tpu_custom_call.1} parent=1 // pred_check
      _
    $region99: #{tpu_custom_call.1} parent=1 // pred_check_branch
      %2255 = sbr.rel (0) target = $region101
    $region100: #{tpu_custom_call.1} parent=1 // pred_region
      %2256 = dma.done [#allocation8], 256
    $region101: #{tpu_custom_call.1} parent=1 // pred_fallthru
      _
    %2257 = vsyncpa [#allocation3], 1
    %2258 = vsyncpa [#allocation5], 1
    %2259 = vsyncpa [#allocation8], 1

</llo_original>
